<compile_context>
chip_gen: v5e
topology: v5e:2x2
jax: 0.10.0
libtpu: 0.0.40
codegen_flags: <defaults>
</compile_context>

<pallas_src>
import functools
import math

import jax
import jax.numpy as jnp
from jax.experimental import pallas as pl
from jax.experimental.pallas import tpu as pltpu


NEG_INF = -1e30  # finite "masked" value; avoids -inf arithmetic corner cases


def _rmsnorm(x, w, eps):
    # Matches RMSNorm.forward: variance in fp32, rsqrt, scale by weight.
    xf = x.astype(jnp.float32)
    var = jnp.mean(xf * xf, axis=-1, keepdims=True)
    return w * (xf * jax.lax.rsqrt(var + eps))


# ---------------------- pass 1: RMSNorm + QKV + rotary ---------------------- #

def qkv_proj_kernel(x_ref, nw_ref, cos_ref, sin_ref, wq_ref, wk_ref, wv_ref,
                    q_ref, k_ref, v_ref, *, eps, n_heads, head_dim):
    half = head_dim // 2
    scale = 1.0 / math.sqrt(head_dim)

    xn = _rmsnorm(x_ref[0], nw_ref[0], eps).astype(jnp.bfloat16)
    # One wide matmul per projection (all heads at once -> full MXU N-dim).
    q = jnp.dot(xn, wq_ref[...], preferred_element_type=jnp.float32)
    k = jnp.dot(xn, wk_ref[...], preferred_element_type=jnp.float32)
    v = jnp.dot(xn, wv_ref[...], preferred_element_type=jnp.float32)

    cos = cos_ref[...]
    sin = sin_ref[...]
    # rotate-half rope per 128-wide head slice (XLU roll, static lane-aligned
    # slices). 1/sqrt(head_dim) folded into q here, once.
    for h in range(n_heads):
        lo = h * head_dim
        qh = q[:, lo:lo + head_dim]
        kh = k[:, lo:lo + head_dim]
        q_ref[0, :, pl.ds(lo, head_dim)] = (
            (qh * cos + pltpu.roll(qh, half, 1) * sin) * scale
        ).astype(q_ref.dtype)
        k_ref[0, :, pl.ds(lo, head_dim)] = (
            kh * cos + pltpu.roll(kh, half, 1) * sin
        ).astype(k_ref.dtype)
    v_ref[0] = v.astype(v_ref.dtype)


# --------------------- pass 2: flash attention + Wo fold -------------------- #

def flash_attn_kernel(q_ref, k_ref, v_ref, wo_ref, o_ref,
                      m_scr, l_scr, acc_scr, attn_acc_scr, s_scr,
                      *, q_tile, kv_tile):
    qi = pl.program_id(1)
    hi = pl.program_id(2)
    kvi = pl.program_id(3)
    n_heads = pl.num_programs(2)
    n_kv = pl.num_programs(3)

    # Fresh wo-projected attention accumulator for this (batch, q-tile).
    @pl.when(jnp.logical_and(hi == 0, kvi == 0))
    def _init_tile():
        attn_acc_scr[...] = jnp.zeros_like(attn_acc_scr)

    # Per-head init of online-softmax state.
    @pl.when(kvi == 0)
    def _init_head():
        m_scr[...] = jnp.full_like(m_scr, NEG_INF)
        l_scr[...] = jnp.zeros_like(l_scr)
        acc_scr[...] = jnp.zeros_like(acc_scr)

    # Flash step over one kv tile; tiles fully above the causal diagonal are
    # skipped (and their DMAs were clamped away by the kv index_map).
    @pl.when(kvi <= qi)
    def _attend():
        s_scr[...] = jax.lax.dot_general(         # q @ k^T, bf16 in, f32 acc
            q_ref[0], k_ref[0], (((1,), (1,)), ((), ())),
            preferred_element_type=jnp.float32)

        # Causal mask only on the diagonal tile (q_tile == kv_tile => all
        # tiles strictly below the diagonal are fully unmasked).
        @pl.when(kvi == qi)
        def _mask_diag():
            r = jax.lax.broadcasted_iota(jnp.int32, (q_tile, kv_tile), 0)
            c = jax.lax.broadcasted_iota(jnp.int32, (q_tile, kv_tile), 1)
            s_scr[...] = jnp.where(r >= c, s_scr[...], NEG_INF)

        s = s_scr[...]
        m_prev = m_scr[...]
        m_new = jnp.maximum(m_prev, jnp.max(s, axis=-1, keepdims=True))
        alpha = jnp.exp(m_prev - m_new)
        p = jnp.exp(s - m_new)
        l_scr[...] = alpha * l_scr[...] + jnp.sum(p, axis=-1, keepdims=True)
        acc_scr[...] = alpha * acc_scr[...] + jnp.dot(
            p.astype(jnp.bfloat16), v_ref[0],
            preferred_element_type=jnp.float32)
        m_scr[...] = m_new

    # End of this head's kv sweep: normalize and fold in its slice of wo.
    # (Runs even if the last kv tile was causally skipped -- skipped steps do
    # not touch m/l/acc, so the state is already final.  Invariant relies on
    # q_tile == kv_tile.)
    @pl.when(kvi == n_kv - 1)
    def _end_head():
        o = acc_scr[...] * pl.reciprocal(l_scr[...], approx=True)
        attn_acc_scr[...] += jnp.dot(o.astype(jnp.bfloat16), wo_ref[...],
                                     preferred_element_type=jnp.float32)

    @pl.when(jnp.logical_and(hi == n_heads - 1, kvi == n_kv - 1))
    def _finalize():
        o_ref[0] = attn_acc_scr[...].astype(o_ref.dtype)


# ------------- pass 3: residual + RMSNorm + SwiGLU FFN (Hf-tiled) ----------- #

def ffn_kernel(x_ref, attn_ref, nw_ref, w1_ref, w3_ref, w2_ref, out_ref,
               h_scr, hn_scr, acc_scr, *, eps):
    fi = pl.program_id(2)
    n_f = pl.num_programs(2)

    @pl.when(fi == 0)
    def _init():
        h = x_ref[0].astype(jnp.float32) + attn_ref[0].astype(jnp.float32)
        h_scr[...] = h
        hn_scr[...] = _rmsnorm(h, nw_ref[0], eps).astype(jnp.bfloat16)
        acc_scr[...] = jnp.zeros_like(acc_scr)

    hn = hn_scr[...]
    g = jnp.dot(hn, w1_ref[...], preferred_element_type=jnp.float32)
    u = jnp.dot(hn, w3_ref[...], preferred_element_type=jnp.float32)
    act = (g * jax.nn.sigmoid(g)) * u                       # SwiGLU slab, f32
    acc_scr[...] += jnp.dot(act.astype(jnp.bfloat16), w2_ref[...],
                            preferred_element_type=jnp.float32)

    @pl.when(fi == n_f - 1)
    def _done():
        out_ref[0] = (h_scr[...] + acc_scr[...]).astype(out_ref.dtype)


# ------------------------------ JAX wrapper -------------------------------- #

def aquila_block(x, kp, cos, sin_signed, *, n_heads, head_dim, eps,
                 q_tile=128, kv_tile=128, row_tile=128, hf_tile=512):
    B, S, D = x.shape
    Hf = kp["w1t"].shape[1]
    assert D == n_heads * head_dim

    q_tile = min(q_tile, S)
    kv_tile = min(kv_tile, S)
    row_tile = min(row_tile, S)
    hf_tile = min(hf_tile, Hf)
    assert S % q_tile == 0 and S % kv_tile == 0 and S % row_tile == 0
    assert q_tile == kv_tile          # causal tile-skip / diag-mask invariant
    assert Hf % hf_tile == 0 and (hf_tile % 128 == 0 or hf_tile == Hf)
    nq, nkv = S // q_tile, S // kv_tile
    nrow, nf = S // row_tile, Hf // hf_tile

    # ---- pass 1: Q/K/V (rotary applied, q pre-scaled), once per row tile ----
    q, k, v = pl.pallas_call(
        functools.partial(qkv_proj_kernel, eps=eps, n_heads=n_heads,
                          head_dim=head_dim),
        out_shape=(jax.ShapeDtypeStruct((B, S, D), jnp.bfloat16),
                   jax.ShapeDtypeStruct((B, S, D), jnp.bfloat16),
                   jax.ShapeDtypeStruct((B, S, D), jnp.bfloat16)),
        grid=(B, nrow),
        in_specs=[
            pl.BlockSpec((1, row_tile, D), lambda b, i: (b, i, 0)),      # x
            pl.BlockSpec((1, D), lambda b, i: (0, 0)),                   # attn norm w
            pl.BlockSpec((row_tile, head_dim), lambda b, i: (i, 0)),     # cos
            pl.BlockSpec((row_tile, head_dim), lambda b, i: (i, 0)),     # signed sin
            pl.BlockSpec((D, D), lambda b, i: (0, 0)),                   # wq
            pl.BlockSpec((D, D), lambda b, i: (0, 0)),                   # wk
            pl.BlockSpec((D, D), lambda b, i: (0, 0)),                   # wv
        ],
        out_specs=[pl.BlockSpec((1, row_tile, D), lambda b, i: (b, i, 0))] * 3,
        compiler_params=pltpu.CompilerParams(
            dimension_semantics=("parallel", "parallel")),
    )(x, kp["attn_norm_w"], cos, sin_signed,
      kp["wqt"], kp["wkt"], kp["wvt"])

    # ---- pass 2: flash attention + per-head Wo fold ----
    attn = pl.pallas_call(
        functools.partial(flash_attn_kernel, q_tile=q_tile, kv_tile=kv_tile),
        out_shape=jax.ShapeDtypeStruct((B, S, D), jnp.float32),
        grid=(B, nq, n_heads, nkv),
        in_specs=[
            pl.BlockSpec((1, q_tile, head_dim),
                         lambda b, qi, h, kv: (b, qi, h)),               # q
            # kv index clamped to the causal bound: no DMA for skipped tiles.
            pl.BlockSpec((1, kv_tile, head_dim),
                         lambda b, qi, h, kv: (b, jnp.minimum(kv, qi), h)),  # k
            pl.BlockSpec((1, kv_tile, head_dim),
                         lambda b, qi, h, kv: (b, jnp.minimum(kv, qi), h)),  # v
            pl.BlockSpec((head_dim, D), lambda b, qi, h, kv: (h, 0)),    # wo rows
        ],
        out_specs=pl.BlockSpec((1, q_tile, D), lambda b, qi, h, kv: (b, qi, 0)),
        scratch_shapes=[
            pltpu.VMEM((q_tile, 1), jnp.float32),          # online-softmax m
            pltpu.VMEM((q_tile, 1), jnp.float32),          # online-softmax l
            pltpu.VMEM((q_tile, head_dim), jnp.float32),   # softmax @ V acc
            pltpu.VMEM((q_tile, D), jnp.float32),          # sum_h o_h @ wo_h
            pltpu.VMEM((q_tile, kv_tile), jnp.float32),    # score tile
        ],
        compiler_params=pltpu.CompilerParams(
            dimension_semantics=("parallel", "parallel",
                                 "arbitrary", "arbitrary")),
    )(q, k, v, kp["wot"])

    # ---- pass 3: residual + RMSNorm + SwiGLU FFN tiled over Hf + residual ----
    out = pl.pallas_call(
        functools.partial(ffn_kernel, eps=eps),
        out_shape=jax.ShapeDtypeStruct((B, S, D), x.dtype),
        grid=(B, nrow, nf),
        in_specs=[
            pl.BlockSpec((1, row_tile, D), lambda b, i, f: (b, i, 0)),   # x
            pl.BlockSpec((1, row_tile, D), lambda b, i, f: (b, i, 0)),   # attn out
            pl.BlockSpec((1, D), lambda b, i, f: (0, 0)),                # ffn norm w
            pl.BlockSpec((D, hf_tile), lambda b, i, f: (0, f)),          # w1 cols
            pl.BlockSpec((D, hf_tile), lambda b, i, f: (0, f)),          # w3 cols
            pl.BlockSpec((hf_tile, D), lambda b, i, f: (f, 0)),          # w2 rows
        ],
        out_specs=pl.BlockSpec((1, row_tile, D), lambda b, i, f: (b, i, 0)),
        scratch_shapes=[
            pltpu.VMEM((row_tile, D), jnp.float32),        # h = x + attn
            pltpu.VMEM((row_tile, D), jnp.bfloat16),       # rmsnorm(h)
            pltpu.VMEM((row_tile, D), jnp.float32),        # FFN accumulator
        ],
        compiler_params=pltpu.CompilerParams(
            dimension_semantics=("parallel", "parallel", "arbitrary")),
    )(x, attn, kp["ffn_norm_w"], kp["w1t"], kp["w3t"], kp["w2t"])
    return out


# --------------------------- param / table setup ---------------------------- #

def precompute_rotary_half(seq, head_dim, theta=10000.0):
    """cos / signed-sin tables in rotate-half layout, shape (S, head_dim)."""
    freqs = 1.0 / (theta ** (jnp.arange(0, head_dim, 2, dtype=jnp.float32)
                             / head_dim))
    ang = jnp.outer(jnp.arange(seq, dtype=jnp.float32), freqs)   # (S, hd//2)
    cos = jnp.concatenate([jnp.cos(ang), jnp.cos(ang)], axis=-1)
    sin_signed = jnp.concatenate([-jnp.sin(ang), jnp.sin(ang)], axis=-1)
    return cos, sin_signed


def prepare_kernel_params(params, n_heads, head_dim):
    """bf16-cast weights; permute Wq/Wk columns: interleaved -> rotate-half."""
    perm = jnp.concatenate([jnp.arange(0, head_dim, 2),
                            jnp.arange(1, head_dim, 2)])

    def permute_cols(w):   # (D_in, n_heads*head_dim)
        w3 = w.reshape(w.shape[0], n_heads, head_dim)[:, :, perm]
        return w3.reshape(w.shape[0], -1)

    kp = dict(params)      # norm weights stay f32
    kp["wqt"] = permute_cols(params["wqt"]).astype(jnp.bfloat16)
    kp["wkt"] = permute_cols(params["wkt"]).astype(jnp.bfloat16)
    for name in ("wvt", "wot", "w1t", "w2t", "w3t"):
        kp[name] = params[name].astype(jnp.bfloat16)
    return kp


def init_params(key, dim, hidden_dim):
    keys = jax.random.split(key, 7)
    s = 0.05
    return {
        "attn_norm_w": jnp.ones((1, dim), jnp.float32),
        "ffn_norm_w": jnp.ones((1, dim), jnp.float32),
        "wqt": s * jax.random.normal(keys[0], (dim, dim), jnp.float32),
        "wkt": s * jax.random.normal(keys[1], (dim, dim), jnp.float32),
        "wvt": s * jax.random.normal(keys[2], (dim, dim), jnp.float32),
        "wot": s * jax.random.normal(keys[3], (dim, dim), jnp.float32),
        "w1t": s * jax.random.normal(keys[4], (dim, hidden_dim), jnp.float32),
        "w2t": s * jax.random.normal(keys[5], (hidden_dim, dim), jnp.float32),
        "w3t": s * jax.random.normal(keys[6], (dim, hidden_dim), jnp.float32),
    }


# --------------------------- pure-JAX reference ----------------------------- #
# Faithful f32 reference with the original interleaved-pair rotary convention
# and a dense causal mask (validates the kernel's permutation/mask tricks too).

def reference(x, params, n_heads, head_dim, eps, theta=10000.0):
    B, S, D = x.shape
    freqs = 1.0 / (theta ** (jnp.arange(0, head_dim, 2, dtype=jnp.float32)
                             / head_dim))
    ang = jnp.outer(jnp.arange(S, dtype=jnp.float32), freqs)     # (S, hd//2)
    cosh, sinh = jnp.cos(ang), jnp.sin(ang)

    def rope(t):   # (B, S, H, hd), interleaved complex pairs
        tr = t.reshape(*t.shape[:-1], head_dim // 2, 2)
        t0, t1 = tr[..., 0], tr[..., 1]
        c = cosh[None, :, None, :]
        s = sinh[None, :, None, :]
        return jnp.stack([t0 * c - t1 * s, t0 * s + t1 * c], -1).reshape(t.shape)

    def rms(v, w):
        var = jnp.mean(v.astype(jnp.float32) ** 2, -1, keepdims=True)
        return w * (v * jax.lax.rsqrt(var + eps))

    xn = rms(x, params["attn_norm_w"][0])
    q = rope((xn @ params["wqt"]).reshape(B, S, n_heads, head_dim))
    k = rope((xn @ params["wkt"]).reshape(B, S, n_heads, head_dim))
    v = (xn @ params["wvt"]).reshape(B, S, n_heads, head_dim)
    mask = jnp.triu(jnp.full((S, S), -jnp.inf, jnp.float32), k=1)
    sc = jnp.einsum("bqhd,bkhd->bhqk", q, k) / math.sqrt(head_dim)
    p = jax.nn.softmax(sc + mask[None, None], axis=-1)
    o = jnp.einsum("bhqk,bkhd->bqhd", p, v).reshape(B, S, D)
    h = x + o @ params["wot"]
    hn = rms(h, params["ffn_norm_w"][0])
    ff = (jax.nn.silu(hn @ params["w1t"]) * (hn @ params["w3t"])) @ params["w2t"]
    return h + ff


# --------------------------------- main ------------------------------------- #

if __name__ == "__main__":
    B, S, D, n_heads = 2, 32, 256, 2
    head_dim = D // n_heads          # 128 -> lane-native per-head layout
    multiple_of = 256
    eps = 1e-6

    # AQUILAForward hidden dim: 4*dim -> 2/3 -> round up to multiple_of
    hidden_dim = 4 * D
    hidden_dim = int(2 * hidden_dim / 3)
    hidden_dim = multiple_of * ((hidden_dim + multiple_of - 1) // multiple_of)

    key = jax.random.PRNGKey(0)
    kx, kp = jax.random.split(key)
    x = jax.random.normal(kx, (B, S, D), jnp.float32)
    params = init_params(kp, D, hidden_dim)

    cos, sin_signed = precompute_rotary_half(S, head_dim)
    kparams = prepare_kernel_params(params, n_heads, head_dim)

    # Small tiles for the small test shapes; at model scale the defaults
    # (128/128/128/512) engage instead.
    out = aquila_block(x, kparams, cos, sin_signed,
                       n_heads=n_heads, head_dim=head_dim, eps=eps,
                       q_tile=16, kv_tile=16, row_tile=16, hf_tile=256)
    out = jax.block_until_ready(out)

    ref = reference(x, params, n_heads, head_dim, eps)
    assert out.shape == ref.shape == (B, S, D)
    rel = jnp.sqrt(jnp.sum((out - ref) ** 2) / jnp.sum(ref ** 2))
    assert float(rel) < 2e-2, f"mismatch vs f32 reference: rel_l2={float(rel):.4f}"

    print("KERNEL_OK")
</pallas_src>

<mosaic_0001>
module attributes {stable_mosaic.version = 11 : i64} {
  func.func @qkv_proj_kernel(%arg0: i32, %arg1: i32, %arg2: memref<1x16x256xf32, #tpu.memory_space<vmem>>, %arg3: memref<1x256xf32, #tpu.memory_space<vmem>>, %arg4: memref<16x128xf32, #tpu.memory_space<vmem>>, %arg5: memref<16x128xf32, #tpu.memory_space<vmem>>, %arg6: memref<256x256xbf16, #tpu.memory_space<vmem>>, %arg7: memref<256x256xbf16, #tpu.memory_space<vmem>>, %arg8: memref<256x256xbf16, #tpu.memory_space<vmem>>, %arg9: memref<1x16x256xbf16, #tpu.memory_space<vmem>>, %arg10: memref<1x16x256xbf16, #tpu.memory_space<vmem>>, %arg11: memref<1x16x256xbf16, #tpu.memory_space<vmem>>) attributes {dimension_semantics = [#tpu.dimension_semantics<parallel>, #tpu.dimension_semantics<parallel>], iteration_bounds = array<i64: 2, 2>, scalar_prefetch = 0 : i64, scratch_operands = 0 : i64, tpu.core_type = #tpu.core_type<tc>, window_params = [{transform_indices = @transform_0, window_bounds = array<i64: 1, 16, 256>}, {pipeline_mode = #tpu.pipeline_mode<synchronous>, transform_indices = @transform_1, window_bounds = array<i64: 1, 256>}, {transform_indices = @transform_2, window_bounds = array<i64: 16, 128>}, {transform_indices = @transform_3, window_bounds = array<i64: 16, 128>}, {pipeline_mode = #tpu.pipeline_mode<synchronous>, transform_indices = @transform_4, window_bounds = array<i64: 256, 256>}, {pipeline_mode = #tpu.pipeline_mode<synchronous>, transform_indices = @transform_5, window_bounds = array<i64: 256, 256>}, {pipeline_mode = #tpu.pipeline_mode<synchronous>, transform_indices = @transform_6, window_bounds = array<i64: 256, 256>}, {transform_indices = @transform_7, window_bounds = array<i64: 1, 16, 256>}, {transform_indices = @transform_8, window_bounds = array<i64: 1, 16, 256>}, {transform_indices = @transform_9, window_bounds = array<i64: 1, 16, 256>}]} {
    %c0 = arith.constant 0 : index
    %c0_0 = arith.constant 0 : index
    %c0_1 = arith.constant 0 : index
    %0 = vector.load %arg2[%c0, %c0_0, %c0_1] : memref<1x16x256xf32, #tpu.memory_space<vmem>>, vector<1x16x256xf32>
    %1 = vector.shape_cast %0 : vector<1x16x256xf32> to vector<16x256xf32>
    %c0_2 = arith.constant 0 : index
    %c0_3 = arith.constant 0 : index
    %2 = vector.load %arg3[%c0_2, %c0_3] : memref<1x256xf32, #tpu.memory_space<vmem>>, vector<1x256xf32>
    %3 = vector.shape_cast %2 : vector<1x256xf32> to vector<256xf32>
    %4 = arith.mulf %1, %1 : vector<16x256xf32>
    %cst = arith.constant dense<0.000000e+00> : vector<16xf32>
    %5 = vector.multi_reduction <add>, %4, %cst [1] : vector<16x256xf32> to vector<16xf32>
    %6 = vector.shape_cast %5 : vector<16xf32> to vector<16x1xf32>
    %cst_4 = arith.constant 2.560000e+02 : f32
    %7 = vector.broadcast %cst_4 : f32 to vector<16x1xf32>
    %8 = arith.divf %6, %7 : vector<16x1xf32>
    %cst_5 = arith.constant 9.99999997E-7 : f32
    %9 = vector.broadcast %cst_5 : f32 to vector<16x1xf32>
    %10 = arith.addf %8, %9 : vector<16x1xf32>
    %11 = math.rsqrt %10 : vector<16x1xf32>
    %12 = vector.broadcast %11 : vector<16x1xf32> to vector<16x256xf32>
    %13 = arith.mulf %1, %12 : vector<16x256xf32>
    %14 = vector.shape_cast %3 : vector<256xf32> to vector<1x256xf32>
    %15 = vector.broadcast %14 : vector<1x256xf32> to vector<16x256xf32>
    %16 = arith.mulf %15, %13 : vector<16x256xf32>
    %17 = arith.truncf %16 : vector<16x256xf32> to vector<16x256xbf16>
    %c0_6 = arith.constant 0 : index
    %c0_7 = arith.constant 0 : index
    %18 = vector.load %arg6[%c0_6, %c0_7] : memref<256x256xbf16, #tpu.memory_space<vmem>>, vector<256x256xbf16>
    %cst_8 = arith.constant dense<0.000000e+00> : vector<16x256xf32>
    %19 = tpu.matmul %17, %18, %cst_8 {dimension_numbers = #tpu.dot_dimension_numbers<[1], [0], [0], [1], [0, 0, 1, 1], [], []>} : vector<16x256xbf16>, vector<256x256xbf16>, vector<16x256xf32> -> vector<16x256xf32>
    %c0_9 = arith.constant 0 : index
    %c0_10 = arith.constant 0 : index
    %20 = vector.load %arg7[%c0_9, %c0_10] : memref<256x256xbf16, #tpu.memory_space<vmem>>, vector<256x256xbf16>
    %cst_11 = arith.constant dense<0.000000e+00> : vector<16x256xf32>
    %21 = tpu.matmul %17, %20, %cst_11 {dimension_numbers = #tpu.dot_dimension_numbers<[1], [0], [0], [1], [0, 0, 1, 1], [], []>} : vector<16x256xbf16>, vector<256x256xbf16>, vector<16x256xf32> -> vector<16x256xf32>
    %c0_12 = arith.constant 0 : index
    %c0_13 = arith.constant 0 : index
    %22 = vector.load %arg8[%c0_12, %c0_13] : memref<256x256xbf16, #tpu.memory_space<vmem>>, vector<256x256xbf16>
    %cst_14 = arith.constant dense<0.000000e+00> : vector<16x256xf32>
    %23 = tpu.matmul %17, %22, %cst_14 {dimension_numbers = #tpu.dot_dimension_numbers<[1], [0], [0], [1], [0, 0, 1, 1], [], []>} : vector<16x256xbf16>, vector<256x256xbf16>, vector<16x256xf32> -> vector<16x256xf32>
    %c0_15 = arith.constant 0 : index
    %c0_16 = arith.constant 0 : index
    %24 = vector.load %arg4[%c0_15, %c0_16] : memref<16x128xf32, #tpu.memory_space<vmem>>, vector<16x128xf32>
    %c0_17 = arith.constant 0 : index
    %c0_18 = arith.constant 0 : index
    %25 = vector.load %arg5[%c0_17, %c0_18] : memref<16x128xf32, #tpu.memory_space<vmem>>, vector<16x128xf32>
    %26 = vector.extract_strided_slice %19 {offsets = [0, 0], sizes = [16, 128], strides = [1, 1]} : vector<16x256xf32> to vector<16x128xf32>
    %27 = vector.extract_strided_slice %21 {offsets = [0, 0], sizes = [16, 128], strides = [1, 1]} : vector<16x256xf32> to vector<16x128xf32>
    %28 = arith.mulf %26, %24 : vector<16x128xf32>
    %c64_i32 = arith.constant 64 : i32
    %29 = tpu.dynamic_rotate %26 by %c64_i32 dim 1 : vector<16x128xf32>, i32 -> vector<16x128xf32>
    %30 = arith.mulf %29, %25 : vector<16x128xf32>
    %31 = arith.addf %28, %30 : vector<16x128xf32>
    %cst_19 = arith.constant 0.0883883461 : f32
    %32 = vector.broadcast %cst_19 : f32 to vector<16x128xf32>
    %33 = arith.mulf %31, %32 : vector<16x128xf32>
    %34 = arith.truncf %33 : vector<16x128xf32> to vector<16x128xbf16>
    %c0_20 = arith.constant 0 : index
    %c0_21 = arith.constant 0 : index
    %c0_22 = arith.constant 0 : index
    %35 = vector.load %arg9[%c0_20, %c0_21, %c0_22] : memref<1x16x256xbf16, #tpu.memory_space<vmem>>, vector<1x16x128xbf16>
    %36 = vector.shape_cast %35 : vector<1x16x128xbf16> to vector<16x128xbf16>
    %37 = vector.shape_cast %34 : vector<16x128xbf16> to vector<1x16x128xbf16>
    tpu.vector_store %arg9[%c0_20, %c0_21, %c0_22], %37 {strides = array<i32>} : memref<1x16x256xbf16, #tpu.memory_space<vmem>>, vector<1x16x128xbf16>,
    %38 = arith.mulf %27, %24 : vector<16x128xf32>
    %c64_i32_23 = arith.constant 64 : i32
    %39 = tpu.dynamic_rotate %27 by %c64_i32_23 dim 1 : vector<16x128xf32>, i32 -> vector<16x128xf32>
    %40 = arith.mulf %39, %25 : vector<16x128xf32>
    %41 = arith.addf %38, %40 : vector<16x128xf32>
    %42 = arith.truncf %41 : vector<16x128xf32> to vector<16x128xbf16>
    %c0_24 = arith.constant 0 : index
    %c0_25 = arith.constant 0 : index
    %c0_26 = arith.constant 0 : index
    %43 = vector.load %arg10[%c0_24, %c0_25, %c0_26] : memref<1x16x256xbf16, #tpu.memory_space<vmem>>, vector<1x16x128xbf16>
    %44 = vector.shape_cast %43 : vector<1x16x128xbf16> to vector<16x128xbf16>
    %45 = vector.shape_cast %42 : vector<16x128xbf16> to vector<1x16x128xbf16>
    tpu.vector_store %arg10[%c0_24, %c0_25, %c0_26], %45 {strides = array<i32>} : memref<1x16x256xbf16, #tpu.memory_space<vmem>>, vector<1x16x128xbf16>,
    %46 = vector.extract_strided_slice %19 {offsets = [0, 128], sizes = [16, 128], strides = [1, 1]} : vector<16x256xf32> to vector<16x128xf32>
    %47 = vector.extract_strided_slice %21 {offsets = [0, 128], sizes = [16, 128], strides = [1, 1]} : vector<16x256xf32> to vector<16x128xf32>
    %48 = arith.mulf %46, %24 : vector<16x128xf32>
    %c64_i32_27 = arith.constant 64 : i32
    %49 = tpu.dynamic_rotate %46 by %c64_i32_27 dim 1 : vector<16x128xf32>, i32 -> vector<16x128xf32>
    %50 = arith.mulf %49, %25 : vector<16x128xf32>
    %51 = arith.addf %48, %50 : vector<16x128xf32>
    %cst_28 = arith.constant 0.0883883461 : f32
    %52 = vector.broadcast %cst_28 : f32 to vector<16x128xf32>
    %53 = arith.mulf %51, %52 : vector<16x128xf32>
    %54 = arith.truncf %53 : vector<16x128xf32> to vector<16x128xbf16>
    %c0_29 = arith.constant 0 : index
    %c0_30 = arith.constant 0 : index
    %c128 = arith.constant 128 : index
    %55 = vector.load %arg9[%c0_29, %c0_30, %c128] : memref<1x16x256xbf16, #tpu.memory_space<vmem>>, vector<1x16x128xbf16>
    %56 = vector.shape_cast %55 : vector<1x16x128xbf16> to vector<16x128xbf16>
    %57 = vector.shape_cast %54 : vector<16x128xbf16> to vector<1x16x128xbf16>
    tpu.vector_store %arg9[%c0_29, %c0_30, %c128], %57 {strides = array<i32>} : memref<1x16x256xbf16, #tpu.memory_space<vmem>>, vector<1x16x128xbf16>,
    %58 = arith.mulf %47, %24 : vector<16x128xf32>
    %c64_i32_31 = arith.constant 64 : i32
    %59 = tpu.dynamic_rotate %47 by %c64_i32_31 dim 1 : vector<16x128xf32>, i32 -> vector<16x128xf32>
    %60 = arith.mulf %59, %25 : vector<16x128xf32>
    %61 = arith.addf %58, %60 : vector<16x128xf32>
    %62 = arith.truncf %61 : vector<16x128xf32> to vector<16x128xbf16>
    %c0_32 = arith.constant 0 : index
    %c0_33 = arith.constant 0 : index
    %c128_34 = arith.constant 128 : index
    %63 = vector.load %arg10[%c0_32, %c0_33, %c128_34] : memref<1x16x256xbf16, #tpu.memory_space<vmem>>, vector<1x16x128xbf16>
    %64 = vector.shape_cast %63 : vector<1x16x128xbf16> to vector<16x128xbf16>
    %65 = vector.shape_cast %62 : vector<16x128xbf16> to vector<1x16x128xbf16>
    tpu.vector_store %arg10[%c0_32, %c0_33, %c128_34], %65 {strides = array<i32>} : memref<1x16x256xbf16, #tpu.memory_space<vmem>>, vector<1x16x128xbf16>,
    %66 = arith.truncf %23 : vector<16x256xf32> to vector<16x256xbf16>
    %c0_35 = arith.constant 0 : index
    %c0_36 = arith.constant 0 : index
    %c0_37 = arith.constant 0 : index
    %67 = vector.load %arg11[%c0_35, %c0_36, %c0_37] : memref<1x16x256xbf16, #tpu.memory_space<vmem>>, vector<1x16x256xbf16>
    %68 = vector.shape_cast %67 : vector<1x16x256xbf16> to vector<16x256xbf16>
    %69 = vector.shape_cast %66 : vector<16x256xbf16> to vector<1x16x256xbf16>
    tpu.vector_store %arg11[%c0_35, %c0_36, %c0_37], %69 {strides = array<i32>} : memref<1x16x256xbf16, #tpu.memory_space<vmem>>, vector<1x16x256xbf16>,
    return
  }
  func.func @transform_0(%arg0: i32, %arg1: i32) -> (i32, i32, i32) {
    %c0_i32 = arith.constant 0 : i32
    %c0_i32_0 = arith.constant 0 : i32
    return %arg0, %arg1, %c0_i32 : i32, i32, i32
  }
  func.func @transform_1(%arg0: i32, %arg1: i32) -> (i32, i32) {
    %c0_i32 = arith.constant 0 : i32
    %c0_i32_0 = arith.constant 0 : i32
    %c0_i32_1 = arith.constant 0 : i32
    return %c0_i32, %c0_i32_0 : i32, i32
  }
  func.func @transform_2(%arg0: i32, %arg1: i32) -> (i32, i32) {
    %c0_i32 = arith.constant 0 : i32
    %c0_i32_0 = arith.constant 0 : i32
    return %arg1, %c0_i32 : i32, i32
  }
  func.func @transform_3(%arg0: i32, %arg1: i32) -> (i32, i32) {
    %c0_i32 = arith.constant 0 : i32
    %c0_i32_0 = arith.constant 0 : i32
    return %arg1, %c0_i32 : i32, i32
  }
  func.func @transform_4(%arg0: i32, %arg1: i32) -> (i32, i32) {
    %c0_i32 = arith.constant 0 : i32
    %c0_i32_0 = arith.constant 0 : i32
    %c0_i32_1 = arith.constant 0 : i32
    return %c0_i32, %c0_i32_0 : i32, i32
  }
  func.func @transform_5(%arg0: i32, %arg1: i32) -> (i32, i32) {
    %c0_i32 = arith.constant 0 : i32
    %c0_i32_0 = arith.constant 0 : i32
    %c0_i32_1 = arith.constant 0 : i32
    return %c0_i32, %c0_i32_0 : i32, i32
  }
  func.func @transform_6(%arg0: i32, %arg1: i32) -> (i32, i32) {
    %c0_i32 = arith.constant 0 : i32
    %c0_i32_0 = arith.constant 0 : i32
    %c0_i32_1 = arith.constant 0 : i32
    return %c0_i32, %c0_i32_0 : i32, i32
  }
  func.func @transform_7(%arg0: i32, %arg1: i32) -> (i32, i32, i32) {
    %c0_i32 = arith.constant 0 : i32
    %c0_i32_0 = arith.constant 0 : i32
    return %arg0, %arg1, %c0_i32 : i32, i32, i32
  }
  func.func @transform_8(%arg0: i32, %arg1: i32) -> (i32, i32, i32) {
    %c0_i32 = arith.constant 0 : i32
    %c0_i32_0 = arith.constant 0 : i32
    return %arg0, %arg1, %c0_i32 : i32, i32, i32
  }
  func.func @transform_9(%arg0: i32, %arg1: i32) -> (i32, i32, i32) {
    %c0_i32 = arith.constant 0 : i32
    %c0_i32_0 = arith.constant 0 : i32
    return %arg0, %arg1, %c0_i32 : i32, i32, i32
  }
}

</mosaic_0001>

<llo_original>
// kernel: tpu_custom_call.1
$region0: #{tpu_custom_call.1}
  #allocation0 [shape = 'u32[]', space=smem, size = 0x4, offset = 0x4, fixed_abs, tag = 'smem constant byte address 0x4 - core index']
  #allocation1 [shape = 'u32[72,128]{1,0:T(1,128)}', space=vmem, size = 0x9000, scoped, tag = 'internal scratch']
  %s0 = inlined_call_operand.hbm [shape: f32[2,32,256], index: 0, kind: input, shape index: {}]
  %s1 = inlined_call_operand.hbm [shape: f32[1,256], index: 1, kind: input, shape index: {}]
  %s2 = inlined_call_operand.hbm [shape: f32[32,128], index: 2, kind: input, shape index: {}]
  %s3 = inlined_call_operand.hbm [shape: f32[32,128], index: 3, kind: input, shape index: {}]
  %s4 = inlined_call_operand.hbm [shape: bf16[256,256], index: 4, kind: input, shape index: {}]
  %s5 = inlined_call_operand.hbm [shape: bf16[256,256], index: 5, kind: input, shape index: {}]
  %s6 = inlined_call_operand.hbm [shape: bf16[256,256], index: 6, kind: input, shape index: {}]
  %s7 = inlined_call_operand.hbm [shape: bf16[2,32,256], index: 7, kind: output, shape index: {0}]
  %s8 = inlined_call_operand.hbm [shape: bf16[2,32,256], index: 8, kind: output, shape index: {1}]
  %s9 = inlined_call_operand.hbm [shape: bf16[2,32,256], index: 9, kind: output, shape index: {2}]
  %10 = xla_tuple %s7, %s8, %s9
  %s11 = sld [smem:[#allocation0]]
  $region105: #{tpu_custom_call.1} parent=0
    _
  %s13 = ssub.s32 1, %s11
  %s14 = scalar_select 0, %s13, %s11
  $region1: #{tpu_custom_call.1} parent=0
    #allocation2 [shape = 'u8[32768]{0}', space=vmem, size = 0x8000, scoped, tag = 'input window, operand 0']
    #allocation3 [shape = 's32[2]{0}', space=sflag, size = 0x8, scoped, tag = 'scoped memory for tpu_custom_call.1']
    #allocation4 [shape = 's32[2]{0}', space=sflag, size = 0x8, scoped, tag = 'scoped memory for tpu_custom_call.1']
    #allocation5 [shape = 'u8[1024]{0}', space=vmem, size = 0x400, scoped, tag = 'input window, operand 1, single buffered']
    #allocation6 [shape = 's32[1]{0}', space=sflag, size = 0x4, scoped, tag = 'scoped memory for tpu_custom_call.1']
    #allocation7 [shape = 'u8[16384]{0}', space=vmem, size = 0x4000, scoped, tag = 'input window, operand 2']
    #allocation8 [shape = 'u8[16384]{0}', space=vmem, size = 0x4000, scoped, tag = 'input window, operand 3']
    #allocation9 [shape = 'u8[131072]{0}', space=vmem, size = 0x20000, scoped, tag = 'input window, operand 4, single buffered']
    #allocation10 [shape = 'u8[131072]{0}', space=vmem, size = 0x20000, scoped, tag = 'input window, operand 5, single buffered']
    #allocation11 [shape = 's32[1]{0}', space=sflag, size = 0x4, scoped, tag = 'scoped memory for tpu_custom_call.1']
    #allocation12 [shape = 'u8[131072]{0}', space=vmem, size = 0x20000, scoped, tag = 'input window, operand 6, single buffered']
    #allocation13 [shape = 'u8[16384]{0}', space=vmem, size = 0x4000, scoped, tag = 'output window, operand 0']
    #allocation14 [shape = 'u8[16384]{0}', space=vmem, size = 0x4000, scoped, tag = 'output window, operand 1']
    #allocation15 [shape = 's32[2]{0}', space=sflag, size = 0x8, scoped, tag = 'scoped memory for tpu_custom_call.1']
    #allocation16 [shape = 'u8[16384]{0}', space=vmem, size = 0x4000, scoped, tag = 'output window, operand 2']
    %15 = vsyncpa [#allocation3], 0
    %s16 = scalar_lea.sflag [#allocation3], 1
    %17 = vsyncpa %s16, 0
    %18 = vsyncpa [#allocation6], 0
    %19 = vsyncpa [#allocation11], 0
    %20 = vsyncpa [#allocation4], 0
    %s21 = scalar_lea.sflag [#allocation4], 1
    %22 = vsyncpa %s21, 0
    %23 = vsyncpa [#allocation15], 0
    %s24 = scalar_lea.sflag [#allocation15], 1
    %25 = vsyncpa %s24, 0
    loop: start=0, step=1, limit=6
    $region2: #{tpu_custom_call.1} parent=1 // loop_pre_header
      _
    $region3: #{tpu_custom_call.1} parent=1 // loop_header
      %s27 = sphi 0, %s31
      %p28 = scmp.ge.s32.totalorder %s27, 6
      %s34 = sphi 0, %s46
      %s35 = sphi 0, %s42
      %s36 = sphi 0, %s34
      %s37 = sphi 0, %s35
      %s38 = sphi 0, %s36
      %s39 = sphi 0, %s37
      %s51 = sphi 0, %s53
      %s54 = sphi 0, %s51
      %s55 = sphi 0, %s54
      %s71 = sphi 0, %s55
      %s75 = sphi 0, %s75
      %s77 = sphi 0, %s75
      %s78 = sphi 0, %s77
      %s92 = sphi 0, %s78
      %s98 = sphi 0, %s100
      %s101 = sphi 0, %s98
      %s102 = sphi 0, %s101
      %s118 = sphi 0, %s102
      %s124 = sphi 0, %s126
      %s127 = sphi 0, %s124
      %s128 = sphi 0, %s127
      %s144 = sphi 0, %s128
      %s148 = sphi 0, %s148
      %s150 = sphi 0, %s148
      %s151 = sphi 0, %s150
      %s165 = sphi 0, %s151
      %s169 = sphi 0, %s169
      %s171 = sphi 0, %s169
      %s172 = sphi 0, %s171
      %s186 = sphi 0, %s172
      %s190 = sphi 0, %s190
      %s192 = sphi 0, %s190
      %s193 = sphi 0, %s192
      %s207 = sphi 0, %s193
      %s215 = sphi 0, %s217
      %s218 = sphi 0, %s215
      %s219 = sphi 0, %s218
      %s235 = sphi 0, %s219
      %s243 = sphi 0, %s245
      %s246 = sphi 0, %s243
      %s247 = sphi 0, %s246
      %s263 = sphi 0, %s247
      %s271 = sphi 0, %s273
      %s274 = sphi 0, %s271
      %s275 = sphi 0, %s274
      %s291 = sphi 0, %s275
    $region4: #{tpu_custom_call.1} parent=1 // loop_header_branch
      %30 = sbr.rel (%p28) target = $region8
    $region5: #{tpu_custom_call.1} parent=1 // loop_body
      %s32 = ssub.s32 %s27, 1
      %s33 = ssub.s32 %s27, 2
      %s40 = sadd.s32 1, %s35
      %p41 = scmp.ge.s32.totalorder %s40, 2
      %s42 = scalar_select %p41, 0, %s40
      %s43 = sadd.s32 1, %s34
      %s44 = scalar_select %p41, %s43, %s34
      %p45 = scmp.ge.s32.totalorder %s44, 2
      %s46 = scalar_select %p45, 0, %s44
      %s47 = ssub.s32 %s34, %s46
      %s48 = ssub.s32 %s35, %s42
      %s49 = sor.u32 %s47, %s48
      %p50 = scmp.eq.s32.totalorder %s49, 0
      %s52 = sadd.s32 %s51, 1
      %s53 = scalar_select %p50, %s51, %s52
      %p56 = pneg %p50
      %p57 = scmp.eq.s32.totalorder %s27, 3
      %p58 = por %p56, %p57
      %p59 = scmp.ne.s32.totalorder %s51, %s54
      %p60 = scmp.eq.s32.totalorder %s27, 0
      %p61 = por %p59, %p60
      %p62 = scmp.ne.s32.totalorder %s51, %s54
      %p63 = scmp.eq.s32.totalorder %s32, 3
      %p64 = por %p62, %p63
      %p65 = scmp.ne.s32.totalorder %s54, %s55
      %p66 = scmp.eq.s32.totalorder %s32, 0
      %p67 = por %p65, %p66
      %p68 = scmp.ne.s32.totalorder %s54, %s55
      %p69 = scmp.eq.s32.totalorder %s33, 3
      %p70 = por %p68, %p69
      %p72 = scmp.ne.s32.totalorder %s55, %s71
      %p73 = scmp.eq.s32.totalorder %s33, 0
      %p74 = por %p72, %p73
      %s76 = sadd.s32 %s75, 1
      %p79 = scmp.eq.s32.totalorder %s27, 3
      %p80 = scmp.ne.s32.totalorder %s75, %s77
      %p81 = scmp.eq.s32.totalorder %s27, 0
      %p82 = por %p80, %p81
      %p83 = scmp.ne.s32.totalorder %s75, %s77
      %p84 = scmp.eq.s32.totalorder %s32, 3
      %p85 = por %p83, %p84
      %p86 = scmp.ne.s32.totalorder %s77, %s78
      %p87 = scmp.eq.s32.totalorder %s32, 0
      %p88 = por %p86, %p87
      %p89 = scmp.ne.s32.totalorder %s77, %s78
      %p90 = scmp.eq.s32.totalorder %s33, 3
      %p91 = por %p89, %p90
      %p93 = scmp.ne.s32.totalorder %s78, %s92
      %p94 = scmp.eq.s32.totalorder %s33, 0
      %p95 = por %p93, %p94
      %s96 = ssub.s32 %s35, %s42
      %p97 = scmp.eq.s32.totalorder %s96, 0
      %s99 = sadd.s32 %s98, 1
      %s100 = scalar_select %p97, %s98, %s99
      %p103 = pneg %p97
      %p104 = scmp.eq.s32.totalorder %s27, 3
      %p105 = por %p103, %p104
      %p106 = scmp.ne.s32.totalorder %s98, %s101
      %p107 = scmp.eq.s32.totalorder %s27, 0
      %p108 = por %p106, %p107
      %p109 = scmp.ne.s32.totalorder %s98, %s101
      %p110 = scmp.eq.s32.totalorder %s32, 3
      %p111 = por %p109, %p110
      %p112 = scmp.ne.s32.totalorder %s101, %s102
      %p113 = scmp.eq.s32.totalorder %s32, 0
      %p114 = por %p112, %p113
      %p115 = scmp.ne.s32.totalorder %s101, %s102
      %p116 = scmp.eq.s32.totalorder %s33, 3
      %p117 = por %p115, %p116
      %p119 = scmp.ne.s32.totalorder %s102, %s118
      %p120 = scmp.eq.s32.totalorder %s33, 0
      %p121 = por %p119, %p120
      %s122 = ssub.s32 %s35, %s42
      %p123 = scmp.eq.s32.totalorder %s122, 0
      %s125 = sadd.s32 %s124, 1
      %s126 = scalar_select %p123, %s124, %s125
      %p129 = pneg %p123
      %p130 = scmp.eq.s32.totalorder %s27, 3
      %p131 = por %p129, %p130
      %p132 = scmp.ne.s32.totalorder %s124, %s127
      %p133 = scmp.eq.s32.totalorder %s27, 0
      %p134 = por %p132, %p133
      %p135 = scmp.ne.s32.totalorder %s124, %s127
      %p136 = scmp.eq.s32.totalorder %s32, 3
      %p137 = por %p135, %p136
      %p138 = scmp.ne.s32.totalorder %s127, %s128
      %p139 = scmp.eq.s32.totalorder %s32, 0
      %p140 = por %p138, %p139
      %p141 = scmp.ne.s32.totalorder %s127, %s128
      %p142 = scmp.eq.s32.totalorder %s33, 3
      %p143 = por %p141, %p142
      %p145 = scmp.ne.s32.totalorder %s128, %s144
      %p146 = scmp.eq.s32.totalorder %s33, 0
      %p147 = por %p145, %p146
      %s149 = sadd.s32 %s148, 1
      %p152 = scmp.eq.s32.totalorder %s27, 3
      %p153 = scmp.ne.s32.totalorder %s148, %s150
      %p154 = scmp.eq.s32.totalorder %s27, 0
      %p155 = por %p153, %p154
      %p156 = scmp.ne.s32.totalorder %s148, %s150
      %p157 = scmp.eq.s32.totalorder %s32, 3
      %p158 = por %p156, %p157
      %p159 = scmp.ne.s32.totalorder %s150, %s151
      %p160 = scmp.eq.s32.totalorder %s32, 0
      %p161 = por %p159, %p160
      %p162 = scmp.ne.s32.totalorder %s150, %s151
      %p163 = scmp.eq.s32.totalorder %s33, 3
      %p164 = por %p162, %p163
      %p166 = scmp.ne.s32.totalorder %s151, %s165
      %p167 = scmp.eq.s32.totalorder %s33, 0
      %p168 = por %p166, %p167
      %s170 = sadd.s32 %s169, 1
      %p173 = scmp.eq.s32.totalorder %s27, 3
      %p174 = scmp.ne.s32.totalorder %s169, %s171
      %p175 = scmp.eq.s32.totalorder %s27, 0
      %p176 = por %p174, %p175
      %p177 = scmp.ne.s32.totalorder %s169, %s171
      %p178 = scmp.eq.s32.totalorder %s32, 3
      %p179 = por %p177, %p178
      %p180 = scmp.ne.s32.totalorder %s171, %s172
      %p181 = scmp.eq.s32.totalorder %s32, 0
      %p182 = por %p180, %p181
      %p183 = scmp.ne.s32.totalorder %s171, %s172
      %p184 = scmp.eq.s32.totalorder %s33, 3
      %p185 = por %p183, %p184
      %p187 = scmp.ne.s32.totalorder %s172, %s186
      %p188 = scmp.eq.s32.totalorder %s33, 0
      %p189 = por %p187, %p188
      %s191 = sadd.s32 %s190, 1
      %p194 = scmp.eq.s32.totalorder %s27, 3
      %p195 = scmp.ne.s32.totalorder %s190, %s192
      %p196 = scmp.eq.s32.totalorder %s27, 0
      %p197 = por %p195, %p196
      %p198 = scmp.ne.s32.totalorder %s190, %s192
      %p199 = scmp.eq.s32.totalorder %s32, 3
      %p200 = por %p198, %p199
      %p201 = scmp.ne.s32.totalorder %s192, %s193
      %p202 = scmp.eq.s32.totalorder %s32, 0
      %p203 = por %p201, %p202
      %p204 = scmp.ne.s32.totalorder %s192, %s193
      %p205 = scmp.eq.s32.totalorder %s33, 3
      %p206 = por %p204, %p205
      %p208 = scmp.ne.s32.totalorder %s193, %s207
      %p209 = scmp.eq.s32.totalorder %s33, 0
      %p210 = por %p208, %p209
      %s211 = ssub.s32 %s34, %s46
      %s212 = ssub.s32 %s35, %s42
      %s213 = sor.u32 %s211, %s212
      %p214 = scmp.eq.s32.totalorder %s213, 0
      %s216 = sadd.s32 %s215, 1
      %s217 = scalar_select %p214, %s215, %s216
      %p220 = pneg %p214
      %p221 = scmp.eq.s32.totalorder %s27, 3
      %p222 = por %p220, %p221
      %p223 = scmp.ne.s32.totalorder %s215, %s218
      %p224 = scmp.eq.s32.totalorder %s27, 0
      %p225 = por %p223, %p224
      %p226 = scmp.ne.s32.totalorder %s215, %s218
      %p227 = scmp.eq.s32.totalorder %s32, 3
      %p228 = por %p226, %p227
      %p229 = scmp.ne.s32.totalorder %s218, %s219
      %p230 = scmp.eq.s32.totalorder %s32, 0
      %p231 = por %p229, %p230
      %p232 = scmp.ne.s32.totalorder %s218, %s219
      %p233 = scmp.eq.s32.totalorder %s33, 3
      %p234 = por %p232, %p233
      %p236 = scmp.ne.s32.totalorder %s219, %s235
      %p237 = scmp.eq.s32.totalorder %s33, 0
      %p238 = por %p236, %p237
      %s239 = ssub.s32 %s34, %s46
      %s240 = ssub.s32 %s35, %s42
      %s241 = sor.u32 %s239, %s240
      %p242 = scmp.eq.s32.totalorder %s241, 0
      %s244 = sadd.s32 %s243, 1
      %s245 = scalar_select %p242, %s243, %s244
      %p248 = pneg %p242
      %p249 = scmp.eq.s32.totalorder %s27, 3
      %p250 = por %p248, %p249
      %p251 = scmp.ne.s32.totalorder %s243, %s246
      %p252 = scmp.eq.s32.totalorder %s27, 0
      %p253 = por %p251, %p252
      %p254 = scmp.ne.s32.totalorder %s243, %s246
      %p255 = scmp.eq.s32.totalorder %s32, 3
      %p256 = por %p254, %p255
      %p257 = scmp.ne.s32.totalorder %s246, %s247
      %p258 = scmp.eq.s32.totalorder %s32, 0
      %p259 = por %p257, %p258
      %p260 = scmp.ne.s32.totalorder %s246, %s247
      %p261 = scmp.eq.s32.totalorder %s33, 3
      %p262 = por %p260, %p261
      %p264 = scmp.ne.s32.totalorder %s247, %s263
      %p265 = scmp.eq.s32.totalorder %s33, 0
      %p266 = por %p264, %p265
      %s267 = ssub.s32 %s34, %s46
      %s268 = ssub.s32 %s35, %s42
      %s269 = sor.u32 %s267, %s268
      %p270 = scmp.eq.s32.totalorder %s269, 0
      %s272 = sadd.s32 %s271, 1
      %s273 = scalar_select %p270, %s271, %s272
      %p276 = pneg %p270
      %p277 = scmp.eq.s32.totalorder %s27, 3
      %p278 = por %p276, %p277
      %p279 = scmp.ne.s32.totalorder %s271, %s274
      %p280 = scmp.eq.s32.totalorder %s27, 0
      %p281 = por %p279, %p280
      %p282 = scmp.ne.s32.totalorder %s271, %s274
      %p283 = scmp.eq.s32.totalorder %s32, 3
      %p284 = por %p282, %p283
      %p285 = scmp.ne.s32.totalorder %s274, %s275
      %p286 = scmp.eq.s32.totalorder %s32, 0
      %p287 = por %p285, %p286
      %p288 = scmp.ne.s32.totalorder %s274, %s275
      %p289 = scmp.eq.s32.totalorder %s33, 3
      %p290 = por %p288, %p289
      %p292 = scmp.ne.s32.totalorder %s275, %s291
      %p293 = scmp.eq.s32.totalorder %s33, 0
      %p294 = por %p292, %p293
      %p295 = scmp.le.s32.totalorder 1, %s27
      %p296 = scmp.lt.s32.totalorder %s27, 5
      %p297 = pnand %p295, %p296
      %p298 = pneg %p297
      // Predicated region
      $region9: #{tpu_custom_call.1} parent=5 // pred_check
        _
      $region10: #{tpu_custom_call.1} parent=5 // pred_check_branch
        %300 = sbr.rel (%p297) target = $region12
      $region11: #{tpu_custom_call.1} parent=5 // pred_region
        %s301 = ssub.s32 %s27, 1
        // Predicated region
        $region13: #{tpu_custom_call.1} parent=11 // pred_check
          %p302 = pneg %p88
        $region14: #{tpu_custom_call.1} parent=11 // pred_check_branch
          %304 = sbr.rel (%p302) target = $region16
        $region15: #{tpu_custom_call.1} parent=11 // pred_region
          %306 = vsyncadd [#allocation6], 0
          %s308 = sshll.u32 %s1, 4
          %s309 = int_to_ptr.hbm [resolvable:$true] %s308
          %s310 = sshll.u32 [#allocation5], 4
          %s311 = int_to_ptr.vmem [resolvable:$true] %s310
          %313 = dma.hbm_to_vmem [thread:$0]  %s309, 32, %s311, [#allocation6]
        $region16: #{tpu_custom_call.1} parent=11 // pred_fallthru
          _
        // Predicated region
        $region17: #{tpu_custom_call.1} parent=11 // pred_check
          %p314 = pneg %p161
        $region18: #{tpu_custom_call.1} parent=11 // pred_check_branch
          %316 = sbr.rel (%p314) target = $region20
        $region19: #{tpu_custom_call.1} parent=11 // pred_region
          %318 = vsyncadd [#allocation6], 0
          %s319 = sshll.u32 %s4, 4
          %s320 = int_to_ptr.hbm [resolvable:$true] %s319
          %s321 = sshll.u32 [#allocation9], 4
          %s322 = int_to_ptr.vmem [resolvable:$true] %s321
          %327 = dma.hbm_to_vmem [thread:$0]  %s320, 4096, %s322, [#allocation6], 128, 128, 8
        $region20: #{tpu_custom_call.1} parent=11 // pred_fallthru
          _
        // Predicated region
        $region21: #{tpu_custom_call.1} parent=11 // pred_check
          %p328 = pneg %p182
        $region22: #{tpu_custom_call.1} parent=11 // pred_check_branch
          %330 = sbr.rel (%p328) target = $region24
        $region23: #{tpu_custom_call.1} parent=11 // pred_region
          %332 = vsyncadd [#allocation11], 0
          %s333 = sshll.u32 %s5, 4
          %s334 = int_to_ptr.hbm [resolvable:$true] %s333
          %s335 = sshll.u32 [#allocation10], 4
          %s336 = int_to_ptr.vmem [resolvable:$true] %s335
          %341 = dma.hbm_to_vmem [thread:$0]  %s334, 4096, %s336, [#allocation11], 128, 128, 8
        $region24: #{tpu_custom_call.1} parent=11 // pred_fallthru
          _
        // Predicated region
        $region25: #{tpu_custom_call.1} parent=11 // pred_check
          %p342 = pneg %p203
        $region26: #{tpu_custom_call.1} parent=11 // pred_check_branch
          %344 = sbr.rel (%p342) target = $region28
        $region27: #{tpu_custom_call.1} parent=11 // pred_region
          %346 = vsyncadd [#allocation11], 0
          %s347 = sshll.u32 %s6, 4
          %s348 = int_to_ptr.hbm [resolvable:$true] %s347
          %s349 = sshll.u32 [#allocation12], 4
          %s350 = int_to_ptr.vmem [resolvable:$true] %s349
          %355 = dma.hbm_to_vmem [thread:$0]  %s348, 4096, %s350, [#allocation11], 128, 128, 8
        $region28: #{tpu_custom_call.1} parent=11 // pred_fallthru
          _
      $region12: #{tpu_custom_call.1} parent=5 // pred_fallthru
        _
      %p356 = scmp.lt.s32.totalorder %s27, 4
      // Predicated region
      $region29: #{tpu_custom_call.1} parent=5 // pred_check
        %p357 = pneg %p356
      $region30: #{tpu_custom_call.1} parent=5 // pred_check_branch
        %359 = sbr.rel (%p357) target = $region32
      $region31: #{tpu_custom_call.1} parent=5 // pred_region
        // Predicated region
        $region33: #{tpu_custom_call.1} parent=31 // pred_check
          %p360 = pneg %p61
        $region34: #{tpu_custom_call.1} parent=31 // pred_check_branch
          %362 = sbr.rel (%p360) target = $region36
        $region35: #{tpu_custom_call.1} parent=31 // pred_region
          %s363 = sand.u32 %s27, 1
          %s364 = scalar_lea.sflag [#allocation3], %s363
          %s365 = sand.u32 %s51, 1
          %s366 = smul.addr %s365, 32
          %s367 = scalar_lea.vmem [#allocation2], %s366
          %s368 = smul.u32 2, %s35
          %370 = vsyncadd %s364, 0
          %s371 = smul.addr %s368, 2
          %s372 = smul.addr %s34, 8
          %s373 = sadd.s32 %s371, %s372
          %s374 = smul.addr %s373, 8
          %s375 = scalar_lea.hbm %s0, %s374
          %s376 = sshll.u32 %s375, 4
          %s377 = int_to_ptr.hbm [resolvable:$true] %s376
          %s378 = sshll.u32 %s367, 4
          %s379 = int_to_ptr.vmem [resolvable:$true] %s378
          %384 = dma.hbm_to_vmem [thread:$0]  %s377, 512, %s379, %s364, 256, 256, 16
        $region36: #{tpu_custom_call.1} parent=31 // pred_fallthru
          _
        // Predicated region
        $region37: #{tpu_custom_call.1} parent=31 // pred_check
          %p385 = pneg %p108
        $region38: #{tpu_custom_call.1} parent=31 // pred_check_branch
          %387 = sbr.rel (%p385) target = $region40
        $region39: #{tpu_custom_call.1} parent=31 // pred_region
          %s388 = sand.u32 %s27, 1
          %s389 = scalar_lea.sflag [#allocation3], %s388
          %s390 = sand.u32 %s98, 1
          %s391 = smul.addr %s390, 16
          %s392 = scalar_lea.vmem [#allocation7], %s391
          %s393 = smul.u32 2, %s35
          %395 = vsyncadd %s389, 0
          %s396 = smul.addr %s393, 8
          %s397 = scalar_lea.hbm %s2, %s396
          %s398 = sshll.u32 %s397, 4
          %s399 = int_to_ptr.hbm [resolvable:$true] %s398
          %s400 = sshll.u32 %s392, 4
          %s401 = int_to_ptr.vmem [resolvable:$true] %s400
          %406 = dma.hbm_to_vmem [thread:$0]  %s399, 256, %s401, %s389, 128, 128, 8
        $region40: #{tpu_custom_call.1} parent=31 // pred_fallthru
          _
        // Predicated region
        $region41: #{tpu_custom_call.1} parent=31 // pred_check
          %p407 = pneg %p134
        $region42: #{tpu_custom_call.1} parent=31 // pred_check_branch
          %409 = sbr.rel (%p407) target = $region44
        $region43: #{tpu_custom_call.1} parent=31 // pred_region
          %s410 = sand.u32 %s27, 1
          %s411 = scalar_lea.sflag [#allocation3], %s410
          %s412 = sand.u32 %s124, 1
          %s413 = smul.addr %s412, 16
          %s414 = scalar_lea.vmem [#allocation8], %s413
          %s415 = smul.u32 2, %s35
          %417 = vsyncadd %s411, 0
          %s418 = smul.addr %s415, 8
          %s419 = scalar_lea.hbm %s3, %s418
          %s420 = sshll.u32 %s419, 4
          %s421 = int_to_ptr.hbm [resolvable:$true] %s420
          %s422 = sshll.u32 %s414, 4
          %s423 = int_to_ptr.vmem [resolvable:$true] %s422
          %428 = dma.hbm_to_vmem [thread:$0]  %s421, 256, %s423, %s411, 128, 128, 8
        $region44: #{tpu_custom_call.1} parent=31 // pred_fallthru
          _
      $region32: #{tpu_custom_call.1} parent=5 // pred_fallthru
        _
      %p429 = scmp.le.s32.totalorder 1, %s27
      %p430 = scmp.lt.s32.totalorder %s27, 5
      %p431 = pnand %p429, %p430
      %p432 = pneg %p431
      // Predicated region
      $region45: #{tpu_custom_call.1} parent=5 // pred_check
        _
      $region46: #{tpu_custom_call.1} parent=5 // pred_check_branch
        %434 = sbr.rel (%p431) target = $region48
      $region47: #{tpu_custom_call.1} parent=5 // pred_region
        %s435 = ssub.s32 %s27, 1
        %s436 = sand.u32 %s32, 1
        %s437 = scalar_lea.sflag [#allocation3], %s436
        %s438 = sand.u32 %s54, 1
        %s439 = smul.addr %s438, 32
        %s440 = scalar_lea.vmem [#allocation2], %s439
        // Predicated region
        $region49: #{tpu_custom_call.1} parent=47 // pred_check
          %p441 = pneg %p67
        $region50: #{tpu_custom_call.1} parent=47 // pred_check_branch
          %443 = sbr.rel (%p441) target = $region52
        $region51: #{tpu_custom_call.1} parent=47 // pred_region
          %445 = dma.done %s437, 512
        $region52: #{tpu_custom_call.1} parent=47 // pred_fallthru
          _
        // Predicated region
        $region53: #{tpu_custom_call.1} parent=47 // pred_check
          %p446 = pneg %p88
        $region54: #{tpu_custom_call.1} parent=47 // pred_check_branch
          %448 = sbr.rel (%p446) target = $region56
        $region55: #{tpu_custom_call.1} parent=47 // pred_region
          %450 = dma.done [#allocation6], 32
        $region56: #{tpu_custom_call.1} parent=47 // pred_fallthru
          _
        %s451 = sand.u32 %s32, 1
        %s452 = scalar_lea.sflag [#allocation3], %s451
        %s453 = sand.u32 %s101, 1
        %s454 = smul.addr %s453, 16
        %s455 = scalar_lea.vmem [#allocation7], %s454
        // Predicated region
        $region57: #{tpu_custom_call.1} parent=47 // pred_check
          %p456 = pneg %p114
        $region58: #{tpu_custom_call.1} parent=47 // pred_check_branch
          %458 = sbr.rel (%p456) target = $region60
        $region59: #{tpu_custom_call.1} parent=47 // pred_region
          %460 = dma.done %s452, 256
        $region60: #{tpu_custom_call.1} parent=47 // pred_fallthru
          _
        %s461 = sand.u32 %s32, 1
        %s462 = scalar_lea.sflag [#allocation3], %s461
        %s463 = sand.u32 %s127, 1
        %s464 = smul.addr %s463, 16
        %s465 = scalar_lea.vmem [#allocation8], %s464
        // Predicated region
        $region61: #{tpu_custom_call.1} parent=47 // pred_check
          %p466 = pneg %p140
        $region62: #{tpu_custom_call.1} parent=47 // pred_check_branch
          %468 = sbr.rel (%p466) target = $region64
        $region63: #{tpu_custom_call.1} parent=47 // pred_region
          %470 = dma.done %s462, 256
        $region64: #{tpu_custom_call.1} parent=47 // pred_fallthru
          _
        // Predicated region
        $region65: #{tpu_custom_call.1} parent=47 // pred_check
          %p471 = pneg %p161
        $region66: #{tpu_custom_call.1} parent=47 // pred_check_branch
          %473 = sbr.rel (%p471) target = $region68
        $region67: #{tpu_custom_call.1} parent=47 // pred_region
          %475 = dma.done [#allocation6], 4096
        $region68: #{tpu_custom_call.1} parent=47 // pred_fallthru
          _
        // Predicated region
        $region69: #{tpu_custom_call.1} parent=47 // pred_check
          %p476 = pneg %p182
        $region70: #{tpu_custom_call.1} parent=47 // pred_check_branch
          %478 = sbr.rel (%p476) target = $region72
        $region71: #{tpu_custom_call.1} parent=47 // pred_region
          %480 = dma.done [#allocation11], 4096
        $region72: #{tpu_custom_call.1} parent=47 // pred_fallthru
          _
        // Predicated region
        $region73: #{tpu_custom_call.1} parent=47 // pred_check
          %p481 = pneg %p203
        $region74: #{tpu_custom_call.1} parent=47 // pred_check_branch
          %483 = sbr.rel (%p481) target = $region76
        $region75: #{tpu_custom_call.1} parent=47 // pred_region
          %485 = dma.done [#allocation11], 4096
        $region76: #{tpu_custom_call.1} parent=47 // pred_fallthru
          _
        %s486 = sand.u32 %s32, 1
        %s487 = scalar_lea.sflag [#allocation3], %s486
        %s488 = sand.u32 %s54, 1
        %s489 = smul.addr %s488, 32
        %s490 = scalar_lea.vmem [#allocation2], %s489
        %p491 = pneg %p67
        %p492 = pneg %p64
        %p493 = pneg %p88
        %p494 = pneg %p85
        %s495 = sand.u32 %s32, 1
        %s496 = scalar_lea.sflag [#allocation3], %s495
        %s497 = sand.u32 %s101, 1
        %s498 = smul.addr %s497, 16
        %s499 = scalar_lea.vmem [#allocation7], %s498
        %p500 = pneg %p114
        %p501 = pneg %p111
        %s502 = sand.u32 %s32, 1
        %s503 = scalar_lea.sflag [#allocation3], %s502
        %s504 = sand.u32 %s127, 1
        %s505 = smul.addr %s504, 16
        %s506 = scalar_lea.vmem [#allocation8], %s505
        %p507 = pneg %p140
        %p508 = pneg %p137
        %p509 = pneg %p161
        %p510 = pneg %p158
        %p511 = pneg %p182
        %p512 = pneg %p179
        %p513 = pneg %p203
        %p514 = pneg %p200
        %p515 = pneg %p231
        %p516 = pneg %p228
        %s517 = sand.u32 %s218, 1
        %s518 = scalar_lea.sflag [#allocation4], %s517
        %s519 = sand.u32 %s218, 1
        %s520 = smul.addr %s519, 16
        %s521 = scalar_lea.vmem [#allocation13], %s520
        %p522 = pneg %p259
        %p523 = pneg %p256
        %s524 = sand.u32 %s32, 1
        %s525 = scalar_lea.sflag [#allocation15], %s524
        %s526 = sand.u32 %s246, 1
        %s527 = smul.addr %s526, 16
        %s528 = scalar_lea.vmem [#allocation14], %s527
        %p529 = pneg %p287
        %p530 = pneg %p284
        %s531 = sand.u32 %s32, 1
        %s532 = scalar_lea.sflag [#allocation15], %s531
        %s533 = sand.u32 %s274, 1
        %s534 = smul.addr %s533, 16
        %s535 = scalar_lea.vmem [#allocation16], %s534
        %s536 = smul.u32 2, %s37
        %s537 = smul.u32 2, %s37
        %s538 = smul.u32 2, %s37
        %s539 = smul.u32 2, %s37
        %s540 = smul.u32 2, %s37
        %s541 = smul.u32 2, %s37
        %v542 = vld [vmem:[%s440] sm:$0xff]
        %v543 = vld [vmem:[%s440 + $0x8] sm:$0xff]
        %v544 = vld [vmem:[%s440 + $0x10] sm:$0xff]
        %v545 = vld [vmem:[%s440 + $0x18] sm:$0xff]
        %v546 = vld [vmem:[#allocation5] sm:$0x3]
        %v547 = vmul.f32 %v542, %v542
        %v548 = vmul.f32 %v543, %v543
        %v549 = vmul.f32 %v544, %v544
        %v550 = vmul.f32 %v545, %v545
        %v551 = vadd.f32 %v547, %v548
        %552 = vadd.xlane.f32.xlu0 %v551
        %v553 = vpop.xlane.xlu0 %552
        %v554 = vadd.f32 %v549, %v550
        %555 = vadd.xlane.f32.xlu0 %v554
        %v556 = vpop.xlane.xlu0 %555
        %v557 = vrcp.pop 256.0
        %v558 = vmul.f32 256.0, %v557
        %v559 = vsub.f32 1.0, %v558
        %v560 = vmul.f32 %v557, %v559
        %v561 = vadd.f32 %v557, %v560
        %vm562 = vweird.f32 %v557
        %v563 = vsel %vm562, %v557, %v561
        %v564 = vmul.f32 %v553, %v563
        %v565 = vmul.f32 %v556, %v563
        %v566 = vadd.f32 %v564, 1e-06
        %v567 = vadd.f32 %v565, 1e-06
        %v568 = vrsqrt.pop %v566
        %v569 = vmul.f32 %v568, %v566
        %v570 = vmul.f32 %v569, %v568
        %v571 = vmul.f32 0.5, %v570
        %v572 = vsub.f32 1.5, %v571
        %v573 = vmul.f32 %v568, %v572
        %vm574 = vweird.f32 %v566
        %vm575 = vweird.f32 %v568
        %vm576 = vmor %vm574, %vm575
        %v577 = vsel %vm576, %v568, %v573
        %v578 = vrsqrt.pop %v567
        %v579 = vmul.f32 %v578, %v567
        %v580 = vmul.f32 %v579, %v578
        %v581 = vmul.f32 0.5, %v580
        %v582 = vsub.f32 1.5, %v581
        %v583 = vmul.f32 %v578, %v582
        %vm584 = vweird.f32 %v567
        %vm585 = vweird.f32 %v578
        %vm586 = vmor %vm584, %vm585
        %v587 = vsel %vm586, %v578, %v583
        %v588 = vmul.f32 %v542, %v577
        %v589 = vmul.f32 %v543, %v577
        %v590 = vmul.f32 %v544, %v587
        %v591 = vmul.f32 %v545, %v587
        %v593 = vperm.slane %v546, 0
        %v594 = vperm.slane %v546, 1
        %v597 = vmul.f32 %v593, %v588
        %v598 = vmul.f32 %v594, %v589
        %v599 = vmul.f32 %v593, %v590
        %v600 = vmul.f32 %v594, %v591
        %v601 = vpack.c.bf16 %v599, %v597
        %v602 = vpack.c.bf16 %v600, %v598
        %v603 = vld [vmem:[#allocation9] sm:$0xff]
        %v604 = vld [vmem:[#allocation9 + $0x8] sm:$0xff]
        %v605 = vld [vmem:[#allocation9 + $0x10] sm:$0xff]
        %v606 = vld [vmem:[#allocation9 + $0x18] sm:$0xff]
        %v607 = vld [vmem:[#allocation9 + $0x20] sm:$0xff]
        %v608 = vld [vmem:[#allocation9 + $0x28] sm:$0xff]
        %v609 = vld [vmem:[#allocation9 + $0x30] sm:$0xff]
        %v610 = vld [vmem:[#allocation9 + $0x38] sm:$0xff]
        %v611 = vld [vmem:[#allocation9 + $0x40] sm:$0xff]
        %v612 = vld [vmem:[#allocation9 + $0x48] sm:$0xff]
        %v613 = vld [vmem:[#allocation9 + $0x50] sm:$0xff]
        %v614 = vld [vmem:[#allocation9 + $0x58] sm:$0xff]
        %v615 = vld [vmem:[#allocation9 + $0x60] sm:$0xff]
        %v616 = vld [vmem:[#allocation9 + $0x68] sm:$0xff]
        %v617 = vld [vmem:[#allocation9 + $0x70] sm:$0xff]
        %v618 = vld [vmem:[#allocation9 + $0x78] sm:$0xff]
        %v619 = vld [vmem:[#allocation9 + $0x80] sm:$0xff]
        %v620 = vld [vmem:[#allocation9 + $0x88] sm:$0xff]
        %v621 = vld [vmem:[#allocation9 + $0x90] sm:$0xff]
        %v622 = vld [vmem:[#allocation9 + $0x98] sm:$0xff]
        %v623 = vld [vmem:[#allocation9 + $0xa0] sm:$0xff]
        %v624 = vld [vmem:[#allocation9 + $0xa8] sm:$0xff]
        %v625 = vld [vmem:[#allocation9 + $0xb0] sm:$0xff]
        %v626 = vld [vmem:[#allocation9 + $0xb8] sm:$0xff]
        %v627 = vld [vmem:[#allocation9 + $0xc0] sm:$0xff]
        %v628 = vld [vmem:[#allocation9 + $0xc8] sm:$0xff]
        %v629 = vld [vmem:[#allocation9 + $0xd0] sm:$0xff]
        %v630 = vld [vmem:[#allocation9 + $0xd8] sm:$0xff]
        %v631 = vld [vmem:[#allocation9 + $0xe0] sm:$0xff]
        %v632 = vld [vmem:[#allocation9 + $0xe8] sm:$0xff]
        %v633 = vld [vmem:[#allocation9 + $0xf0] sm:$0xff]
        %v634 = vld [vmem:[#allocation9 + $0xf8] sm:$0xff]
        %v667 = vunpack.c.l.b16 %v603
        %v668 = vunpack.c.h.b16 %v603
        %v669 = vunpack.c.l.b16 %v604
        %v670 = vunpack.c.h.b16 %v604
        %v671 = vunpack.c.l.b16 %v605
        %v672 = vunpack.c.h.b16 %v605
        %v673 = vunpack.c.l.b16 %v606
        %v674 = vunpack.c.h.b16 %v606
        %v675 = vunpack.c.l.b16 %v607
        %v676 = vunpack.c.h.b16 %v607
        %v677 = vunpack.c.l.b16 %v608
        %v678 = vunpack.c.h.b16 %v608
        %v679 = vunpack.c.l.b16 %v609
        %v680 = vunpack.c.h.b16 %v609
        %v681 = vunpack.c.l.b16 %v610
        %v682 = vunpack.c.h.b16 %v610
        %v683 = vunpack.c.l.b16 %v611
        %v684 = vunpack.c.h.b16 %v611
        %v685 = vunpack.c.l.b16 %v612
        %v686 = vunpack.c.h.b16 %v612
        %v687 = vunpack.c.l.b16 %v613
        %v688 = vunpack.c.h.b16 %v613
        %v689 = vunpack.c.l.b16 %v614
        %v690 = vunpack.c.h.b16 %v614
        %v691 = vunpack.c.l.b16 %v615
        %v692 = vunpack.c.h.b16 %v615
        %v693 = vunpack.c.l.b16 %v616
        %v694 = vunpack.c.h.b16 %v616
        %v695 = vunpack.c.l.b16 %v617
        %v696 = vunpack.c.h.b16 %v617
        %v697 = vunpack.c.l.b16 %v618
        %v698 = vunpack.c.h.b16 %v618
        %v699 = vunpack.c.l.b16 %v619
        %v700 = vunpack.c.h.b16 %v619
        %v701 = vunpack.c.l.b16 %v620
        %v702 = vunpack.c.h.b16 %v620
        %v703 = vunpack.c.l.b16 %v621
        %v704 = vunpack.c.h.b16 %v621
        %v705 = vunpack.c.l.b16 %v622
        %v706 = vunpack.c.h.b16 %v622
        %v707 = vunpack.c.l.b16 %v623
        %v708 = vunpack.c.h.b16 %v623
        %v709 = vunpack.c.l.b16 %v624
        %v710 = vunpack.c.h.b16 %v624
        %v711 = vunpack.c.l.b16 %v625
        %v712 = vunpack.c.h.b16 %v625
        %v713 = vunpack.c.l.b16 %v626
        %v714 = vunpack.c.h.b16 %v626
        %v715 = vunpack.c.l.b16 %v627
        %v716 = vunpack.c.h.b16 %v627
        %v717 = vunpack.c.l.b16 %v628
        %v718 = vunpack.c.h.b16 %v628
        %v719 = vunpack.c.l.b16 %v629
        %v720 = vunpack.c.h.b16 %v629
        %v721 = vunpack.c.l.b16 %v630
        %v722 = vunpack.c.h.b16 %v630
        %v723 = vunpack.c.l.b16 %v631
        %v724 = vunpack.c.h.b16 %v631
        %v725 = vunpack.c.l.b16 %v632
        %v726 = vunpack.c.h.b16 %v632
        %v727 = vunpack.c.l.b16 %v633
        %v728 = vunpack.c.h.b16 %v633
        %v729 = vunpack.c.l.b16 %v634
        %v730 = vunpack.c.h.b16 %v634
        %v731 = vpack.c.b16 %v669, %v667
        %v732 = vpack.c.b16 %v670, %v668
        %v733 = vpack.c.b16 %v673, %v671
        %v734 = vpack.c.b16 %v674, %v672
        %v735 = vpack.c.b16 %v677, %v675
        %v736 = vpack.c.b16 %v678, %v676
        %v737 = vpack.c.b16 %v681, %v679
        %v738 = vpack.c.b16 %v682, %v680
        %v739 = vpack.c.b16 %v685, %v683
        %v740 = vpack.c.b16 %v686, %v684
        %v741 = vpack.c.b16 %v689, %v687
        %v742 = vpack.c.b16 %v690, %v688
        %v743 = vpack.c.b16 %v693, %v691
        %v744 = vpack.c.b16 %v694, %v692
        %v745 = vpack.c.b16 %v697, %v695
        %v746 = vpack.c.b16 %v698, %v696
        %v747 = vpack.c.b16 %v701, %v699
        %v748 = vpack.c.b16 %v702, %v700
        %v749 = vpack.c.b16 %v705, %v703
        %v750 = vpack.c.b16 %v706, %v704
        %v751 = vpack.c.b16 %v709, %v707
        %v752 = vpack.c.b16 %v710, %v708
        %v753 = vpack.c.b16 %v713, %v711
        %v754 = vpack.c.b16 %v714, %v712
        %v755 = vpack.c.b16 %v717, %v715
        %v756 = vpack.c.b16 %v718, %v716
        %v757 = vpack.c.b16 %v721, %v719
        %v758 = vpack.c.b16 %v722, %v720
        %v759 = vpack.c.b16 %v725, %v723
        %v760 = vpack.c.b16 %v726, %v724
        %v761 = vpack.c.b16 %v729, %v727
        %v762 = vpack.c.b16 %v730, %v728
        %795 = vmatpush.bf16.msra.mxu0 %v745
        %796 = vmatpush.bf16.msra.mxu0 %v743
        %797 = vmatpush.bf16.msra.mxu0 %v741
        %798 = vmatpush.bf16.msra.mxu0 %v739
        %799 = vmatpush.bf16.msra.mxu0 %v737
        %800 = vmatpush.bf16.msra.mxu0 %v735
        %801 = vmatpush.bf16.msra.mxu0 %v733
        %802 = vmatpush.bf16.msra.mxu0 %v731
        %803 = vmatmul.bf16.gmra.mxu0 %v601
        %v804 = vpop.f32.mrf.mxu0
        %v805 = vadd.f32 0.0, %v804
        %v806 = vpop.f32.mrf.mxu0
        %v807 = vadd.f32 0.0, %v806
        %808 = vdwg.mxu0
        %809 = vmatpush.bf16.msra.mxu0 %v761
        %810 = vmatpush.bf16.msra.mxu0 %v759
        %811 = vmatpush.bf16.msra.mxu0 %v757
        %812 = vmatpush.bf16.msra.mxu0 %v755
        %813 = vmatpush.bf16.msra.mxu0 %v753
        %814 = vmatpush.bf16.msra.mxu0 %v751
        %815 = vmatpush.bf16.msra.mxu0 %v749
        %816 = vmatpush.bf16.msra.mxu0 %v747
        %817 = vmatmul.bf16.gmra.mxu0 %v602
        %v818 = vpop.f32.mrf.mxu0
        %v819 = vadd.f32 %v805, %v818
        %v820 = vpop.f32.mrf.mxu0
        %v821 = vadd.f32 %v807, %v820
        %822 = vdwg.mxu0
        %823 = vmatpush.bf16.msra.mxu0 %v746
        %824 = vmatpush.bf16.msra.mxu0 %v744
        %825 = vmatpush.bf16.msra.mxu0 %v742
        %826 = vmatpush.bf16.msra.mxu0 %v740
        %827 = vmatpush.bf16.msra.mxu0 %v738
        %828 = vmatpush.bf16.msra.mxu0 %v736
        %829 = vmatpush.bf16.msra.mxu0 %v734
        %830 = vmatpush.bf16.msra.mxu0 %v732
        %831 = vmatmul.bf16.gmra.mxu0 %v601
        %v832 = vpop.f32.mrf.mxu0
        %v833 = vadd.f32 0.0, %v832
        %v834 = vpop.f32.mrf.mxu0
        %v835 = vadd.f32 0.0, %v834
        %836 = vdwg.mxu0
        %837 = vmatpush.bf16.msra.mxu0 %v762
        %838 = vmatpush.bf16.msra.mxu0 %v760
        %839 = vmatpush.bf16.msra.mxu0 %v758
        %840 = vmatpush.bf16.msra.mxu0 %v756
        %841 = vmatpush.bf16.msra.mxu0 %v754
        %842 = vmatpush.bf16.msra.mxu0 %v752
        %843 = vmatpush.bf16.msra.mxu0 %v750
        %844 = vmatpush.bf16.msra.mxu0 %v748
        %845 = vmatmul.bf16.gmra.mxu0 %v602
        %v846 = vpop.f32.mrf.mxu0
        %v847 = vadd.f32 %v833, %v846
        %v848 = vpop.f32.mrf.mxu0
        %v849 = vadd.f32 %v835, %v848
        %850 = vdwg.mxu0
        %v851 = vld [vmem:[#allocation10] sm:$0xff]
        %v852 = vld [vmem:[#allocation10 + $0x8] sm:$0xff]
        %v853 = vld [vmem:[#allocation10 + $0x10] sm:$0xff]
        %v854 = vld [vmem:[#allocation10 + $0x18] sm:$0xff]
        %v855 = vld [vmem:[#allocation10 + $0x20] sm:$0xff]
        %v856 = vld [vmem:[#allocation10 + $0x28] sm:$0xff]
        %v857 = vld [vmem:[#allocation10 + $0x30] sm:$0xff]
        %v858 = vld [vmem:[#allocation10 + $0x38] sm:$0xff]
        %v859 = vld [vmem:[#allocation10 + $0x40] sm:$0xff]
        %v860 = vld [vmem:[#allocation10 + $0x48] sm:$0xff]
        %v861 = vld [vmem:[#allocation10 + $0x50] sm:$0xff]
        %v862 = vld [vmem:[#allocation10 + $0x58] sm:$0xff]
        %v863 = vld [vmem:[#allocation10 + $0x60] sm:$0xff]
        %v864 = vld [vmem:[#allocation10 + $0x68] sm:$0xff]
        %v865 = vld [vmem:[#allocation10 + $0x70] sm:$0xff]
        %v866 = vld [vmem:[#allocation10 + $0x78] sm:$0xff]
        %v867 = vld [vmem:[#allocation10 + $0x80] sm:$0xff]
        %v868 = vld [vmem:[#allocation10 + $0x88] sm:$0xff]
        %v869 = vld [vmem:[#allocation10 + $0x90] sm:$0xff]
        %v870 = vld [vmem:[#allocation10 + $0x98] sm:$0xff]
        %v871 = vld [vmem:[#allocation10 + $0xa0] sm:$0xff]
        %v872 = vld [vmem:[#allocation10 + $0xa8] sm:$0xff]
        %v873 = vld [vmem:[#allocation10 + $0xb0] sm:$0xff]
        %v874 = vld [vmem:[#allocation10 + $0xb8] sm:$0xff]
        %v875 = vld [vmem:[#allocation10 + $0xc0] sm:$0xff]
        %v876 = vld [vmem:[#allocation10 + $0xc8] sm:$0xff]
        %v877 = vld [vmem:[#allocation10 + $0xd0] sm:$0xff]
        %v878 = vld [vmem:[#allocation10 + $0xd8] sm:$0xff]
        %v879 = vld [vmem:[#allocation10 + $0xe0] sm:$0xff]
        %v880 = vld [vmem:[#allocation10 + $0xe8] sm:$0xff]
        %v881 = vld [vmem:[#allocation10 + $0xf0] sm:$0xff]
        %v882 = vld [vmem:[#allocation10 + $0xf8] sm:$0xff]
        %v915 = vunpack.c.l.b16 %v851
        %v916 = vunpack.c.h.b16 %v851
        %v917 = vunpack.c.l.b16 %v852
        %v918 = vunpack.c.h.b16 %v852
        %v919 = vunpack.c.l.b16 %v853
        %v920 = vunpack.c.h.b16 %v853
        %v921 = vunpack.c.l.b16 %v854
        %v922 = vunpack.c.h.b16 %v854
        %v923 = vunpack.c.l.b16 %v855
        %v924 = vunpack.c.h.b16 %v855
        %v925 = vunpack.c.l.b16 %v856
        %v926 = vunpack.c.h.b16 %v856
        %v927 = vunpack.c.l.b16 %v857
        %v928 = vunpack.c.h.b16 %v857
        %v929 = vunpack.c.l.b16 %v858
        %v930 = vunpack.c.h.b16 %v858
        %v931 = vunpack.c.l.b16 %v859
        %v932 = vunpack.c.h.b16 %v859
        %v933 = vunpack.c.l.b16 %v860
        %v934 = vunpack.c.h.b16 %v860
        %v935 = vunpack.c.l.b16 %v861
        %v936 = vunpack.c.h.b16 %v861
        %v937 = vunpack.c.l.b16 %v862
        %v938 = vunpack.c.h.b16 %v862
        %v939 = vunpack.c.l.b16 %v863
        %v940 = vunpack.c.h.b16 %v863
        %v941 = vunpack.c.l.b16 %v864
        %v942 = vunpack.c.h.b16 %v864
        %v943 = vunpack.c.l.b16 %v865
        %v944 = vunpack.c.h.b16 %v865
        %v945 = vunpack.c.l.b16 %v866
        %v946 = vunpack.c.h.b16 %v866
        %v947 = vunpack.c.l.b16 %v867
        %v948 = vunpack.c.h.b16 %v867
        %v949 = vunpack.c.l.b16 %v868
        %v950 = vunpack.c.h.b16 %v868
        %v951 = vunpack.c.l.b16 %v869
        %v952 = vunpack.c.h.b16 %v869
        %v953 = vunpack.c.l.b16 %v870
        %v954 = vunpack.c.h.b16 %v870
        %v955 = vunpack.c.l.b16 %v871
        %v956 = vunpack.c.h.b16 %v871
        %v957 = vunpack.c.l.b16 %v872
        %v958 = vunpack.c.h.b16 %v872
        %v959 = vunpack.c.l.b16 %v873
        %v960 = vunpack.c.h.b16 %v873
        %v961 = vunpack.c.l.b16 %v874
        %v962 = vunpack.c.h.b16 %v874
        %v963 = vunpack.c.l.b16 %v875
        %v964 = vunpack.c.h.b16 %v875
        %v965 = vunpack.c.l.b16 %v876
        %v966 = vunpack.c.h.b16 %v876
        %v967 = vunpack.c.l.b16 %v877
        %v968 = vunpack.c.h.b16 %v877
        %v969 = vunpack.c.l.b16 %v878
        %v970 = vunpack.c.h.b16 %v878
        %v971 = vunpack.c.l.b16 %v879
        %v972 = vunpack.c.h.b16 %v879
        %v973 = vunpack.c.l.b16 %v880
        %v974 = vunpack.c.h.b16 %v880
        %v975 = vunpack.c.l.b16 %v881
        %v976 = vunpack.c.h.b16 %v881
        %v977 = vunpack.c.l.b16 %v882
        %v978 = vunpack.c.h.b16 %v882
        %v979 = vpack.c.b16 %v917, %v915
        %v980 = vpack.c.b16 %v918, %v916
        %v981 = vpack.c.b16 %v921, %v919
        %v982 = vpack.c.b16 %v922, %v920
        %v983 = vpack.c.b16 %v925, %v923
        %v984 = vpack.c.b16 %v926, %v924
        %v985 = vpack.c.b16 %v929, %v927
        %v986 = vpack.c.b16 %v930, %v928
        %v987 = vpack.c.b16 %v933, %v931
        %v988 = vpack.c.b16 %v934, %v932
        %v989 = vpack.c.b16 %v937, %v935
        %v990 = vpack.c.b16 %v938, %v936
        %v991 = vpack.c.b16 %v941, %v939
        %v992 = vpack.c.b16 %v942, %v940
        %v993 = vpack.c.b16 %v945, %v943
        %v994 = vpack.c.b16 %v946, %v944
        %v995 = vpack.c.b16 %v949, %v947
        %v996 = vpack.c.b16 %v950, %v948
        %v997 = vpack.c.b16 %v953, %v951
        %v998 = vpack.c.b16 %v954, %v952
        %v999 = vpack.c.b16 %v957, %v955
        %v1000 = vpack.c.b16 %v958, %v956
        %v1001 = vpack.c.b16 %v961, %v959
        %v1002 = vpack.c.b16 %v962, %v960
        %v1003 = vpack.c.b16 %v965, %v963
        %v1004 = vpack.c.b16 %v966, %v964
        %v1005 = vpack.c.b16 %v969, %v967
        %v1006 = vpack.c.b16 %v970, %v968
        %v1007 = vpack.c.b16 %v973, %v971
        %v1008 = vpack.c.b16 %v974, %v972
        %v1009 = vpack.c.b16 %v977, %v975
        %v1010 = vpack.c.b16 %v978, %v976
        %1043 = vmatpush.bf16.msra.mxu0 %v993
        %1044 = vmatpush.bf16.msra.mxu0 %v991
        %1045 = vmatpush.bf16.msra.mxu0 %v989
        %1046 = vmatpush.bf16.msra.mxu0 %v987
        %1047 = vmatpush.bf16.msra.mxu0 %v985
        %1048 = vmatpush.bf16.msra.mxu0 %v983
        %1049 = vmatpush.bf16.msra.mxu0 %v981
        %1050 = vmatpush.bf16.msra.mxu0 %v979
        %1051 = vmatmul.bf16.gmra.mxu0 %v601
        %v1052 = vpop.f32.mrf.mxu0
        %v1053 = vadd.f32 0.0, %v1052
        %v1054 = vpop.f32.mrf.mxu0
        %v1055 = vadd.f32 0.0, %v1054
        %1056 = vdwg.mxu0
        %1057 = vmatpush.bf16.msra.mxu0 %v1009
        %1058 = vmatpush.bf16.msra.mxu0 %v1007
        %1059 = vmatpush.bf16.msra.mxu0 %v1005
        %1060 = vmatpush.bf16.msra.mxu0 %v1003
        %1061 = vmatpush.bf16.msra.mxu0 %v1001
        %1062 = vmatpush.bf16.msra.mxu0 %v999
        %1063 = vmatpush.bf16.msra.mxu0 %v997
        %1064 = vmatpush.bf16.msra.mxu0 %v995
        %1065 = vmatmul.bf16.gmra.mxu0 %v602
        %v1066 = vpop.f32.mrf.mxu0
        %v1067 = vadd.f32 %v1053, %v1066
        %v1068 = vpop.f32.mrf.mxu0
        %v1069 = vadd.f32 %v1055, %v1068
        %1070 = vdwg.mxu0
        %1071 = vmatpush.bf16.msra.mxu0 %v994
        %1072 = vmatpush.bf16.msra.mxu0 %v992
        %1073 = vmatpush.bf16.msra.mxu0 %v990
        %1074 = vmatpush.bf16.msra.mxu0 %v988
        %1075 = vmatpush.bf16.msra.mxu0 %v986
        %1076 = vmatpush.bf16.msra.mxu0 %v984
        %1077 = vmatpush.bf16.msra.mxu0 %v982
        %1078 = vmatpush.bf16.msra.mxu0 %v980
        %1079 = vmatmul.bf16.gmra.mxu0 %v601
        %v1080 = vpop.f32.mrf.mxu0
        %v1081 = vadd.f32 0.0, %v1080
        %v1082 = vpop.f32.mrf.mxu0
        %v1083 = vadd.f32 0.0, %v1082
        %1084 = vdwg.mxu0
        %1085 = vmatpush.bf16.msra.mxu0 %v1010
        %1086 = vmatpush.bf16.msra.mxu0 %v1008
        %1087 = vmatpush.bf16.msra.mxu0 %v1006
        %1088 = vmatpush.bf16.msra.mxu0 %v1004
        %1089 = vmatpush.bf16.msra.mxu0 %v1002
        %1090 = vmatpush.bf16.msra.mxu0 %v1000
        %1091 = vmatpush.bf16.msra.mxu0 %v998
        %1092 = vmatpush.bf16.msra.mxu0 %v996
        %1093 = vmatmul.bf16.gmra.mxu0 %v602
        %v1094 = vpop.f32.mrf.mxu0
        %v1095 = vadd.f32 %v1081, %v1094
        %v1096 = vpop.f32.mrf.mxu0
        %v1097 = vadd.f32 %v1083, %v1096
        %1098 = vdwg.mxu0
        %v1099 = vld [vmem:[#allocation12] sm:$0xff]
        %v1100 = vld [vmem:[#allocation12 + $0x8] sm:$0xff]
        %v1101 = vld [vmem:[#allocation12 + $0x10] sm:$0xff]
        %v1102 = vld [vmem:[#allocation12 + $0x18] sm:$0xff]
        %v1103 = vld [vmem:[#allocation12 + $0x20] sm:$0xff]
        %v1104 = vld [vmem:[#allocation12 + $0x28] sm:$0xff]
        %v1105 = vld [vmem:[#allocation12 + $0x30] sm:$0xff]
        %v1106 = vld [vmem:[#allocation12 + $0x38] sm:$0xff]
        %v1107 = vld [vmem:[#allocation12 + $0x40] sm:$0xff]
        %v1108 = vld [vmem:[#allocation12 + $0x48] sm:$0xff]
        %v1109 = vld [vmem:[#allocation12 + $0x50] sm:$0xff]
        %v1110 = vld [vmem:[#allocation12 + $0x58] sm:$0xff]
        %v1111 = vld [vmem:[#allocation12 + $0x60] sm:$0xff]
        %v1112 = vld [vmem:[#allocation12 + $0x68] sm:$0xff]
        %v1113 = vld [vmem:[#allocation12 + $0x70] sm:$0xff]
        %v1114 = vld [vmem:[#allocation12 + $0x78] sm:$0xff]
        %v1115 = vld [vmem:[#allocation12 + $0x80] sm:$0xff]
        %v1116 = vld [vmem:[#allocation12 + $0x88] sm:$0xff]
        %v1117 = vld [vmem:[#allocation12 + $0x90] sm:$0xff]
        %v1118 = vld [vmem:[#allocation12 + $0x98] sm:$0xff]
        %v1119 = vld [vmem:[#allocation12 + $0xa0] sm:$0xff]
        %v1120 = vld [vmem:[#allocation12 + $0xa8] sm:$0xff]
        %v1121 = vld [vmem:[#allocation12 + $0xb0] sm:$0xff]
        %v1122 = vld [vmem:[#allocation12 + $0xb8] sm:$0xff]
        %v1123 = vld [vmem:[#allocation12 + $0xc0] sm:$0xff]
        %v1124 = vld [vmem:[#allocation12 + $0xc8] sm:$0xff]
        %v1125 = vld [vmem:[#allocation12 + $0xd0] sm:$0xff]
        %v1126 = vld [vmem:[#allocation12 + $0xd8] sm:$0xff]
        %v1127 = vld [vmem:[#allocation12 + $0xe0] sm:$0xff]
        %v1128 = vld [vmem:[#allocation12 + $0xe8] sm:$0xff]
        %v1129 = vld [vmem:[#allocation12 + $0xf0] sm:$0xff]
        %v1130 = vld [vmem:[#allocation12 + $0xf8] sm:$0xff]
        %v1163 = vunpack.c.l.b16 %v1099
        %v1164 = vunpack.c.h.b16 %v1099
        %v1165 = vunpack.c.l.b16 %v1100
        %v1166 = vunpack.c.h.b16 %v1100
        %v1167 = vunpack.c.l.b16 %v1101
        %v1168 = vunpack.c.h.b16 %v1101
        %v1169 = vunpack.c.l.b16 %v1102
        %v1170 = vunpack.c.h.b16 %v1102
        %v1171 = vunpack.c.l.b16 %v1103
        %v1172 = vunpack.c.h.b16 %v1103
        %v1173 = vunpack.c.l.b16 %v1104
        %v1174 = vunpack.c.h.b16 %v1104
        %v1175 = vunpack.c.l.b16 %v1105
        %v1176 = vunpack.c.h.b16 %v1105
        %v1177 = vunpack.c.l.b16 %v1106
        %v1178 = vunpack.c.h.b16 %v1106
        %v1179 = vunpack.c.l.b16 %v1107
        %v1180 = vunpack.c.h.b16 %v1107
        %v1181 = vunpack.c.l.b16 %v1108
        %v1182 = vunpack.c.h.b16 %v1108
        %v1183 = vunpack.c.l.b16 %v1109
        %v1184 = vunpack.c.h.b16 %v1109
        %v1185 = vunpack.c.l.b16 %v1110
        %v1186 = vunpack.c.h.b16 %v1110
        %v1187 = vunpack.c.l.b16 %v1111
        %v1188 = vunpack.c.h.b16 %v1111
        %v1189 = vunpack.c.l.b16 %v1112
        %v1190 = vunpack.c.h.b16 %v1112
        %v1191 = vunpack.c.l.b16 %v1113
        %v1192 = vunpack.c.h.b16 %v1113
        %v1193 = vunpack.c.l.b16 %v1114
        %v1194 = vunpack.c.h.b16 %v1114
        %v1195 = vunpack.c.l.b16 %v1115
        %v1196 = vunpack.c.h.b16 %v1115
        %v1197 = vunpack.c.l.b16 %v1116
        %v1198 = vunpack.c.h.b16 %v1116
        %v1199 = vunpack.c.l.b16 %v1117
        %v1200 = vunpack.c.h.b16 %v1117
        %v1201 = vunpack.c.l.b16 %v1118
        %v1202 = vunpack.c.h.b16 %v1118
        %v1203 = vunpack.c.l.b16 %v1119
        %v1204 = vunpack.c.h.b16 %v1119
        %v1205 = vunpack.c.l.b16 %v1120
        %v1206 = vunpack.c.h.b16 %v1120
        %v1207 = vunpack.c.l.b16 %v1121
        %v1208 = vunpack.c.h.b16 %v1121
        %v1209 = vunpack.c.l.b16 %v1122
        %v1210 = vunpack.c.h.b16 %v1122
        %v1211 = vunpack.c.l.b16 %v1123
        %v1212 = vunpack.c.h.b16 %v1123
        %v1213 = vunpack.c.l.b16 %v1124
        %v1214 = vunpack.c.h.b16 %v1124
        %v1215 = vunpack.c.l.b16 %v1125
        %v1216 = vunpack.c.h.b16 %v1125
        %v1217 = vunpack.c.l.b16 %v1126
        %v1218 = vunpack.c.h.b16 %v1126
        %v1219 = vunpack.c.l.b16 %v1127
        %v1220 = vunpack.c.h.b16 %v1127
        %v1221 = vunpack.c.l.b16 %v1128
        %v1222 = vunpack.c.h.b16 %v1128
        %v1223 = vunpack.c.l.b16 %v1129
        %v1224 = vunpack.c.h.b16 %v1129
        %v1225 = vunpack.c.l.b16 %v1130
        %v1226 = vunpack.c.h.b16 %v1130
        %v1227 = vpack.c.b16 %v1165, %v1163
        %v1228 = vpack.c.b16 %v1166, %v1164
        %v1229 = vpack.c.b16 %v1169, %v1167
        %v1230 = vpack.c.b16 %v1170, %v1168
        %v1231 = vpack.c.b16 %v1173, %v1171
        %v1232 = vpack.c.b16 %v1174, %v1172
        %v1233 = vpack.c.b16 %v1177, %v1175
        %v1234 = vpack.c.b16 %v1178, %v1176
        %v1235 = vpack.c.b16 %v1181, %v1179
        %v1236 = vpack.c.b16 %v1182, %v1180
        %v1237 = vpack.c.b16 %v1185, %v1183
        %v1238 = vpack.c.b16 %v1186, %v1184
        %v1239 = vpack.c.b16 %v1189, %v1187
        %v1240 = vpack.c.b16 %v1190, %v1188
        %v1241 = vpack.c.b16 %v1193, %v1191
        %v1242 = vpack.c.b16 %v1194, %v1192
        %v1243 = vpack.c.b16 %v1197, %v1195
        %v1244 = vpack.c.b16 %v1198, %v1196
        %v1245 = vpack.c.b16 %v1201, %v1199
        %v1246 = vpack.c.b16 %v1202, %v1200
        %v1247 = vpack.c.b16 %v1205, %v1203
        %v1248 = vpack.c.b16 %v1206, %v1204
        %v1249 = vpack.c.b16 %v1209, %v1207
        %v1250 = vpack.c.b16 %v1210, %v1208
        %v1251 = vpack.c.b16 %v1213, %v1211
        %v1252 = vpack.c.b16 %v1214, %v1212
        %v1253 = vpack.c.b16 %v1217, %v1215
        %v1254 = vpack.c.b16 %v1218, %v1216
        %v1255 = vpack.c.b16 %v1221, %v1219
        %v1256 = vpack.c.b16 %v1222, %v1220
        %v1257 = vpack.c.b16 %v1225, %v1223
        %v1258 = vpack.c.b16 %v1226, %v1224
        %1291 = vmatpush.bf16.msra.mxu0 %v1241
        %1292 = vmatpush.bf16.msra.mxu0 %v1239
        %1293 = vmatpush.bf16.msra.mxu0 %v1237
        %1294 = vmatpush.bf16.msra.mxu0 %v1235
        %1295 = vmatpush.bf16.msra.mxu0 %v1233
        %1296 = vmatpush.bf16.msra.mxu0 %v1231
        %1297 = vmatpush.bf16.msra.mxu0 %v1229
        %1298 = vmatpush.bf16.msra.mxu0 %v1227
        %1299 = vmatmul.bf16.gmra.mxu0 %v601
        %v1300 = vpop.f32.mrf.mxu0
        %v1301 = vadd.f32 0.0, %v1300
        %v1302 = vpop.f32.mrf.mxu0
        %v1303 = vadd.f32 0.0, %v1302
        %1304 = vdwg.mxu0
        %1305 = vmatpush.bf16.msra.mxu0 %v1257
        %1306 = vmatpush.bf16.msra.mxu0 %v1255
        %1307 = vmatpush.bf16.msra.mxu0 %v1253
        %1308 = vmatpush.bf16.msra.mxu0 %v1251
        %1309 = vmatpush.bf16.msra.mxu0 %v1249
        %1310 = vmatpush.bf16.msra.mxu0 %v1247
        %1311 = vmatpush.bf16.msra.mxu0 %v1245
        %1312 = vmatpush.bf16.msra.mxu0 %v1243
        %1313 = vmatmul.bf16.gmra.mxu0 %v602
        %v1314 = vpop.f32.mrf.mxu0
        %v1315 = vadd.f32 %v1301, %v1314
        %v1316 = vpop.f32.mrf.mxu0
        %v1317 = vadd.f32 %v1303, %v1316
        %1318 = vdwg.mxu0
        %1319 = vmatpush.bf16.msra.mxu0 %v1242
        %1320 = vmatpush.bf16.msra.mxu0 %v1240
        %1321 = vmatpush.bf16.msra.mxu0 %v1238
        %1322 = vmatpush.bf16.msra.mxu0 %v1236
        %1323 = vmatpush.bf16.msra.mxu0 %v1234
        %1324 = vmatpush.bf16.msra.mxu0 %v1232
        %1325 = vmatpush.bf16.msra.mxu0 %v1230
        %1326 = vmatpush.bf16.msra.mxu0 %v1228
        %1327 = vmatmul.bf16.gmra.mxu0 %v601
        %v1328 = vpop.f32.mrf.mxu0
        %v1329 = vadd.f32 0.0, %v1328
        %v1330 = vpop.f32.mrf.mxu0
        %v1331 = vadd.f32 0.0, %v1330
        %1332 = vdwg.mxu0
        %1333 = vmatpush.bf16.msra.mxu0 %v1258
        %1334 = vmatpush.bf16.msra.mxu0 %v1256
        %1335 = vmatpush.bf16.msra.mxu0 %v1254
        %1336 = vmatpush.bf16.msra.mxu0 %v1252
        %1337 = vmatpush.bf16.msra.mxu0 %v1250
        %1338 = vmatpush.bf16.msra.mxu0 %v1248
        %1339 = vmatpush.bf16.msra.mxu0 %v1246
        %1340 = vmatpush.bf16.msra.mxu0 %v1244
        %1341 = vmatmul.bf16.gmra.mxu0 %v602
        %v1342 = vpop.f32.mrf.mxu0
        %v1343 = vadd.f32 %v1329, %v1342
        %v1344 = vpop.f32.mrf.mxu0
        %v1345 = vadd.f32 %v1331, %v1344
        %1346 = vdwg.mxu0
        %v1347 = vld [vmem:[%s455] sm:$0xff]
        %v1348 = vld [vmem:[%s455 + $0x8] sm:$0xff]
        %v1349 = vld [vmem:[%s465] sm:$0xff]
        %v1350 = vld [vmem:[%s465 + $0x8] sm:$0xff]
        %v1351 = vmul.f32 %v819, %v1347
        %v1352 = vmul.f32 %v821, %v1348
        %1353 = vrot.lane.b32.xlu0 %v819, 64
        %v1354 = vpop.permute.xlu0 %1353
        %1355 = vrot.lane.b32.xlu0 %v821, 64
        %v1356 = vpop.permute.xlu0 %1355
        %v1357 = vmul.f32 %v1354, %v1349
        %v1358 = vmul.f32 %v1356, %v1350
        %v1359 = vadd.f32 %v1351, %v1357
        %v1360 = vadd.f32 %v1352, %v1358
        %v1361 = vmul.f32 %v1359, 0.088388346
        %v1362 = vmul.f32 %v1360, 0.088388346
        %v1363 = vpack.c.bf16 %v1361, %v1361
        %v1364 = vpack.c.bf16 %v1362, %v1362
        %1365 = vst [vmem:[%s521] sm:$0xf] %v1363
        %1366 = vst [vmem:[%s521 + $0x8] sm:$0xf] %v1364
        %v1367 = vmul.f32 %v1067, %v1347
        %v1368 = vmul.f32 %v1069, %v1348
        %1369 = vrot.lane.b32.xlu0 %v1067, 64
        %v1370 = vpop.permute.xlu0 %1369
        %1371 = vrot.lane.b32.xlu0 %v1069, 64
        %v1372 = vpop.permute.xlu0 %1371
        %v1373 = vmul.f32 %v1370, %v1349
        %v1374 = vmul.f32 %v1372, %v1350
        %v1375 = vadd.f32 %v1367, %v1373
        %v1376 = vadd.f32 %v1368, %v1374
        %v1377 = vpack.c.bf16 %v1375, %v1375
        %v1378 = vpack.c.bf16 %v1376, %v1376
        %1379 = vst [vmem:[%s528] sm:$0xf] %v1377
        %1380 = vst [vmem:[%s528 + $0x8] sm:$0xf] %v1378
        %v1381 = vmul.f32 %v847, %v1347
        %v1382 = vmul.f32 %v849, %v1348
        %1383 = vrot.lane.b32.xlu0 %v847, 64
        %v1384 = vpop.permute.xlu0 %1383
        %1385 = vrot.lane.b32.xlu0 %v849, 64
        %v1386 = vpop.permute.xlu0 %1385
        %v1387 = vmul.f32 %v1384, %v1349
        %v1388 = vmul.f32 %v1386, %v1350
        %v1389 = vadd.f32 %v1381, %v1387
        %v1390 = vadd.f32 %v1382, %v1388
        %v1391 = vmul.f32 %v1389, 0.088388346
        %v1392 = vmul.f32 %v1390, 0.088388346
        %v1393 = vpack.c.bf16 %v1391, %v1391
        %v1394 = vpack.c.bf16 %v1392, %v1392
        %1395 = vst [vmem:[%s521 + $0x4] sm:$0xf] %v1393
        %1396 = vst [vmem:[%s521 + $0xc] sm:$0xf] %v1394
        %v1397 = vmul.f32 %v1095, %v1347
        %v1398 = vmul.f32 %v1097, %v1348
        %1399 = vrot.lane.b32.xlu0 %v1095, 64
        %v1400 = vpop.permute.xlu0 %1399
        %1401 = vrot.lane.b32.xlu0 %v1097, 64
        %v1402 = vpop.permute.xlu0 %1401
        %v1403 = vmul.f32 %v1400, %v1349
        %v1404 = vmul.f32 %v1402, %v1350
        %v1405 = vadd.f32 %v1397, %v1403
        %v1406 = vadd.f32 %v1398, %v1404
        %v1407 = vpack.c.bf16 %v1405, %v1405
        %v1408 = vpack.c.bf16 %v1406, %v1406
        %1409 = vst [vmem:[%s528 + $0x4] sm:$0xf] %v1407
        %1410 = vst [vmem:[%s528 + $0xc] sm:$0xf] %v1408
        %v1411 = vpack.c.bf16 %v1343, %v1315
        %v1412 = vpack.c.bf16 %v1345, %v1317
        %1413 = vst [vmem:[%s535] sm:$0xff] %v1411
        %1414 = vst [vmem:[%s535 + $0x8] sm:$0xff] %v1412
        %s1415 = sand.u32 %s218, 1
        %s1416 = scalar_lea.sflag [#allocation4], %s1415
        %s1417 = sand.u32 %s218, 1
        %s1418 = smul.addr %s1417, 16
        %s1419 = scalar_lea.vmem [#allocation13], %s1418
        %s1420 = sand.u32 %s32, 1
        %s1421 = scalar_lea.sflag [#allocation15], %s1420
        %s1422 = sand.u32 %s246, 1
        %s1423 = smul.addr %s1422, 16
        %s1424 = scalar_lea.vmem [#allocation14], %s1423
        %s1425 = sand.u32 %s32, 1
        %s1426 = scalar_lea.sflag [#allocation15], %s1425
        %s1427 = sand.u32 %s274, 1
        %s1428 = smul.addr %s1427, 16
        %s1429 = scalar_lea.vmem [#allocation16], %s1428
        // Predicated region
        $region77: #{tpu_custom_call.1} parent=47 // pred_check
          %p1430 = pneg %p228
        $region78: #{tpu_custom_call.1} parent=47 // pred_check_branch
          %1432 = sbr.rel (%p1430) target = $region80
        $region79: #{tpu_custom_call.1} parent=47 // pred_region
          %s1433 = smul.u32 2, %s37
          %1435 = vsyncadd %s1416, 0
          %s1436 = smul.addr %s1433, 2
          %s1437 = smul.addr %s36, 8
          %s1438 = sadd.s32 %s1436, %s1437
          %s1439 = smul.addr %s1438, 4
          %s1440 = scalar_lea.hbm %s7, %s1439
          %s1441 = sshll.u32 %s1419, 4
          %s1442 = int_to_ptr.vmem [resolvable:$true] %s1441
          %s1443 = sshll.u32 %s1440, 4
          %s1444 = int_to_ptr.hbm [resolvable:$true] %s1443
          %1449 = dma.vmem_to_hbm [thread:$0]  %s1442, 256, %s1444, %s1416, 128, 128, 8
        $region80: #{tpu_custom_call.1} parent=47 // pred_fallthru
          _
        // Predicated region
        $region81: #{tpu_custom_call.1} parent=47 // pred_check
          %p1450 = pneg %p256
        $region82: #{tpu_custom_call.1} parent=47 // pred_check_branch
          %1452 = sbr.rel (%p1450) target = $region84
        $region83: #{tpu_custom_call.1} parent=47 // pred_region
          %s1453 = smul.u32 2, %s37
          %1455 = vsyncadd %s1421, 0
          %s1456 = smul.addr %s1453, 2
          %s1457 = smul.addr %s36, 8
          %s1458 = sadd.s32 %s1456, %s1457
          %s1459 = smul.addr %s1458, 4
          %s1460 = scalar_lea.hbm %s8, %s1459
          %s1461 = sshll.u32 %s1424, 4
          %s1462 = int_to_ptr.vmem [resolvable:$true] %s1461
          %s1463 = sshll.u32 %s1460, 4
          %s1464 = int_to_ptr.hbm [resolvable:$true] %s1463
          %1469 = dma.vmem_to_hbm [thread:$0]  %s1462, 256, %s1464, %s1421, 128, 128, 8
        $region84: #{tpu_custom_call.1} parent=47 // pred_fallthru
          _
        // Predicated region
        $region85: #{tpu_custom_call.1} parent=47 // pred_check
          %p1470 = pneg %p284
        $region86: #{tpu_custom_call.1} parent=47 // pred_check_branch
          %1472 = sbr.rel (%p1470) target = $region88
        $region87: #{tpu_custom_call.1} parent=47 // pred_region
          %s1473 = smul.u32 2, %s37
          %1475 = vsyncadd %s1426, 0
          %s1476 = smul.addr %s1473, 2
          %s1477 = smul.addr %s36, 8
          %s1478 = sadd.s32 %s1476, %s1477
          %s1479 = smul.addr %s1478, 4
          %s1480 = scalar_lea.hbm %s9, %s1479
          %s1481 = sshll.u32 %s1429, 4
          %s1482 = int_to_ptr.vmem [resolvable:$true] %s1481
          %s1483 = sshll.u32 %s1480, 4
          %s1484 = int_to_ptr.hbm [resolvable:$true] %s1483
          %1489 = dma.vmem_to_hbm [thread:$0]  %s1482, 256, %s1484, %s1426, 128, 128, 8
        $region88: #{tpu_custom_call.1} parent=47 // pred_fallthru
          _
      $region48: #{tpu_custom_call.1} parent=5 // pred_fallthru
        _
      %p1490 = scmp.le.s32.totalorder 2, %s27
      // Predicated region
      $region89: #{tpu_custom_call.1} parent=5 // pred_check
        %p1491 = pneg %p1490
      $region90: #{tpu_custom_call.1} parent=5 // pred_check_branch
        %1493 = sbr.rel (%p1491) target = $region92
      $region91: #{tpu_custom_call.1} parent=5 // pred_region
        %s1494 = ssub.s32 %s27, 2
        // Predicated region
        $region93: #{tpu_custom_call.1} parent=91 // pred_check
          %p1495 = pneg %p234
        $region94: #{tpu_custom_call.1} parent=91 // pred_check_branch
          %1497 = sbr.rel (%p1495) target = $region96
        $region95: #{tpu_custom_call.1} parent=91 // pred_region
          %s1498 = sand.u32 %s219, 1
          %s1499 = scalar_lea.sflag [#allocation4], %s1498
          %s1500 = sand.u32 %s219, 1
          %s1501 = smul.addr %s1500, 16
          %s1502 = scalar_lea.vmem [#allocation13], %s1501
          %1504 = dma.done %s1499, 256
        $region96: #{tpu_custom_call.1} parent=91 // pred_fallthru
          _
        // Predicated region
        $region97: #{tpu_custom_call.1} parent=91 // pred_check
          %p1505 = pneg %p262
        $region98: #{tpu_custom_call.1} parent=91 // pred_check_branch
          %1507 = sbr.rel (%p1505) target = $region100
        $region99: #{tpu_custom_call.1} parent=91 // pred_region
          %s1508 = sand.u32 %s33, 1
          %s1509 = scalar_lea.sflag [#allocation15], %s1508
          %s1510 = sand.u32 %s247, 1
          %s1511 = smul.addr %s1510, 16
          %s1512 = scalar_lea.vmem [#allocation14], %s1511
          %1514 = dma.done %s1509, 256
        $region100: #{tpu_custom_call.1} parent=91 // pred_fallthru
          _
        // Predicated region
        $region101: #{tpu_custom_call.1} parent=91 // pred_check
          %p1515 = pneg %p290
        $region102: #{tpu_custom_call.1} parent=91 // pred_check_branch
          %1517 = sbr.rel (%p1515) target = $region104
        $region103: #{tpu_custom_call.1} parent=91 // pred_region
          %s1518 = sand.u32 %s33, 1
          %s1519 = scalar_lea.sflag [#allocation15], %s1518
          %s1520 = sand.u32 %s275, 1
          %s1521 = smul.addr %s1520, 16
          %s1522 = scalar_lea.vmem [#allocation16], %s1521
          %1524 = dma.done %s1519, 256
        $region104: #{tpu_custom_call.1} parent=91 // pred_fallthru
          _
      $region92: #{tpu_custom_call.1} parent=5 // pred_fallthru
        _
    $region6: #{tpu_custom_call.1} parent=1 // loop_footer
      %s31 = sadd.s32 1, %s27
    $region7: #{tpu_custom_call.1} parent=1 // loop_footer_branch
      %26 = sbr.rel target = $region3
    $region8: #{tpu_custom_call.1} parent=1 // loop_exit
      _
    %1525 = vsyncpa [#allocation3], 1
    %s1526 = scalar_lea.sflag [#allocation3], 1
    %1527 = vsyncpa %s1526, 1
    %1528 = vsyncpa [#allocation6], 1
    %1529 = vsyncpa [#allocation11], 1
    %1530 = vsyncpa [#allocation4], 1
    %s1531 = scalar_lea.sflag [#allocation4], 1
    %1532 = vsyncpa %s1531, 1
    %1533 = vsyncpa [#allocation15], 1
    %s1534 = scalar_lea.sflag [#allocation15], 1
    %1535 = vsyncpa %s1534, 1

</llo_original>
